<compile_context>
chip_gen: v7x
topology: tpu7x:2x2x1
jax: 0.10.0
libtpu: 0.0.40
codegen_flags: <defaults>
</compile_context>

<pallas_src>
import functools
import math

import jax
import jax.numpy as jnp
from jax import lax
from jax.experimental import pallas as pl
from jax.experimental.pallas import tpu as pltpu


# ----------------------- fused decoder-block kernel -------------------------

def _layernorm(y, g, b, eps):
    mu = jnp.mean(y, axis=-1, keepdims=True)
    var = jnp.mean(jnp.square(y - mu), axis=-1, keepdims=True)
    return (y - mu) * lax.rsqrt(var + eps) * g + b


def _decoder_block_kernel(x_ref, wqkv_ref, bqkv_ref, wo_ref, bo_ref,
                          ln1g_ref, ln1b_ref, w1_ref, b1_ref, w2_ref, b2_ref,
                          ln2g_ref, ln2b_ref, o_ref, *, num_heads, eps):
    x = x_ref[...]                                    # (S, D) f32
    S, D = x.shape
    Dh = D // num_heads
    scale = 1.0 / math.sqrt(Dh)

    # Fused QKV projection: (S, D) @ (D, 3D), bf16 MXU inputs, f32 accumulate.
    qkv = jnp.dot(x.astype(jnp.bfloat16), wqkv_ref[...],
                  preferred_element_type=jnp.float32) + bqkv_ref[...]   # (S, 3D)

    # Causal additive mask generated in-kernel (couple of VPU ops, no HBM DMA).
    row = lax.broadcasted_iota(jnp.int32, (S, S), 0)
    col = lax.broadcasted_iota(jnp.int32, (S, S), 1)
    bias = jnp.where(col <= row, 0.0, -1e9)

    # Per-head attention, statically unrolled; result laid out lane-dense (S, D).
    # TODO(synk): for long sequences switch to a flash-style online-softmax with
    # a KV-block grid axis; at demo scale the full (S, S) scores fit in a vreg.
    heads = []
    for h in range(num_heads):
        # Fold the softmax scale into Q (cheaper than scaling the (S,S) scores).
        qh = (qkv[:, h * Dh:(h + 1) * Dh] * scale).astype(jnp.bfloat16)
        kh = qkv[:, D + h * Dh:D + (h + 1) * Dh].astype(jnp.bfloat16)
        vh = qkv[:, 2 * D + h * Dh:2 * D + (h + 1) * Dh].astype(jnp.bfloat16)
        s = lax.dot_general(qh, kh, (((1,), (1,)), ((), ())),
                            preferred_element_type=jnp.float32) + bias
        m = jnp.max(s, axis=-1, keepdims=True)
        e = jnp.exp(s - m)
        p = e * pl.reciprocal(jnp.sum(e, axis=-1, keepdims=True), approx=True)
        heads.append(jnp.dot(p.astype(jnp.bfloat16), vh,
                             preferred_element_type=jnp.float32))
    attn = jnp.concatenate(heads, axis=-1)            # (S, D), heads on lanes

    # Output projection + residual + LayerNorm (fused epilogue).
    attn = jnp.dot(attn.astype(jnp.bfloat16), wo_ref[...],
                   preferred_element_type=jnp.float32) + bo_ref[...]
    h1 = _layernorm(x + attn, ln1g_ref[...], ln1b_ref[...], eps)

    # FFN (ReLU) + residual + LayerNorm.
    ff = jnp.dot(h1.astype(jnp.bfloat16), w1_ref[...],
                 preferred_element_type=jnp.float32) + b1_ref[...]
    ff = jnp.maximum(ff, 0.0)
    ff = jnp.dot(ff.astype(jnp.bfloat16), w2_ref[...],
                 preferred_element_type=jnp.float32) + b2_ref[...]
    o_ref[...] = _layernorm(h1 + ff, ln2g_ref[...], ln2b_ref[...], eps)


def pallas_decoder_block(x, p, num_heads, eps=1e-5):
    B, S, D = x.shape
    F = p["w1"].shape[1]

    def w_spec(shape):
        # Constant index map -> weight tile stays resident across the batch grid.
        return pl.BlockSpec(shape, lambda b: (0,) * len(shape))

    act_spec = pl.BlockSpec((None, S, D), lambda b: (b, 0, 0))
    return pl.pallas_call(
        functools.partial(_decoder_block_kernel, num_heads=num_heads, eps=eps),
        grid=(B,),
        in_specs=[act_spec,
                  w_spec((D, 3 * D)), w_spec((1, 3 * D)),
                  w_spec((D, D)), w_spec((1, D)),
                  w_spec((1, D)), w_spec((1, D)),
                  w_spec((D, F)), w_spec((1, F)),
                  w_spec((F, D)), w_spec((1, D)),
                  w_spec((1, D)), w_spec((1, D))],
        out_specs=act_spec,
        out_shape=jax.ShapeDtypeStruct((B, S, D), jnp.float32),
        compiler_params=pltpu.CompilerParams(dimension_semantics=("parallel",)),
    )(x, p["wqkv"], p["bqkv"], p["wo"], p["bo"],
      p["ln1_g"], p["ln1_b"], p["w1"], p["b1"], p["w2"], p["b2"],
      p["ln2_g"], p["ln2_b"])


# ------------------ tiled linear (final vocab projection) -------------------

def _linear_kernel(x_ref, w_ref, b_ref, o_ref, acc_ref):
    @pl.when(pl.program_id(2) == 0)
    def _():
        acc_ref[...] = jnp.zeros_like(acc_ref)

    acc_ref[...] += jnp.dot(x_ref[...].astype(jnp.bfloat16), w_ref[...],
                            preferred_element_type=jnp.float32)

    @pl.when(pl.program_id(2) == pl.num_programs(2) - 1)
    def _():
        o_ref[...] = acc_ref[...] + b_ref[...]


def _pick_tile(dim, candidates, prefer_split=False):
    if prefer_split:
        for c in candidates:
            if dim % c == 0 and dim // c >= 2:
                return c
    for c in candidates:
        if dim % c == 0:
            return c
    return dim


def pallas_linear(x, w, b):
    """Tiled (M,K)@(K,N)+b; w is bf16, N is a multiple of 128 (lane-dense)."""
    M, K = x.shape
    N = w.shape[1]
    tm = _pick_tile(M, (256, 128, 64, 32, 16, 8), prefer_split=True)
    tn = _pick_tile(N, (512, 256, 128))
    tk = _pick_tile(K, (512, 256, 128))
    grid = (M // tm, N // tn, K // tk)
    ce = pl.CostEstimate(flops=2 * M * N * K, transcendentals=0,
                         bytes_accessed=4 * M * K + 2 * K * N + 4 * N + 4 * M * N)
    return pl.pallas_call(
        _linear_kernel,
        grid=grid,
        in_specs=[pl.BlockSpec((tm, tk), lambda i, j, k: (i, k)),
                  pl.BlockSpec((tk, tn), lambda i, j, k: (k, j)),
                  pl.BlockSpec((1, tn), lambda i, j, k: (0, j))],
        out_specs=pl.BlockSpec((tm, tn), lambda i, j, k: (i, j)),
        out_shape=jax.ShapeDtypeStruct((M, N), jnp.float32),
        scratch_shapes=[pltpu.VMEM((tm, tn), jnp.float32)],
        compiler_params=pltpu.CompilerParams(
            dimension_semantics=("parallel", "parallel", "arbitrary")),
        cost_estimate=ce,
    )(x, w, b)


# ------------------------------ model (glue) --------------------------------

def sinusoidal_pe(max_len, d):
    pos = jnp.arange(max_len, dtype=jnp.float32)[:, None]
    i = jnp.arange(0, d, 2, dtype=jnp.float32)
    div = jnp.exp(-math.log(10000.0) * i / d)
    pe = jnp.zeros((max_len, d), jnp.float32)
    pe = pe.at[:, 0::2].set(jnp.sin(pos * div))
    pe = pe.at[:, 1::2].set(jnp.cos(pos * div))
    return pe


def init_params(key, vocab_size, embed_dim, num_layers, num_heads, ff_dim, max_len):
    D, F = embed_dim, ff_dim

    def dense(k, fan_in, fan_out, dtype=jnp.bfloat16):
        return (jax.random.normal(k, (fan_in, fan_out), jnp.float32) * 0.02).astype(dtype)

    keys = jax.random.split(key, 2 + num_layers)
    params = {
        "vocab_size": vocab_size,
        "embed": jax.random.normal(keys[0], (vocab_size, D), jnp.float32) * 0.02,
        "pe": sinusoidal_pe(max_len, D),
        "layers": [],
    }
    for li in range(num_layers):
        lk = jax.random.split(keys[2 + li], 6)
        wq, wk, wv = dense(lk[0], D, D), dense(lk[1], D, D), dense(lk[2], D, D)
        params["layers"].append({
            # matmul weights in bf16 (MXU inputs); biases / LN params in f32
            "wqkv": jnp.concatenate([wq, wk, wv], axis=1),        # (D, 3D) bf16
            "bqkv": jnp.zeros((1, 3 * D), jnp.float32),
            "wo": dense(lk[3], D, D), "bo": jnp.zeros((1, D), jnp.float32),
            "ln1_g": jnp.ones((1, D), jnp.float32), "ln1_b": jnp.zeros((1, D), jnp.float32),
            "w1": dense(lk[4], D, F), "b1": jnp.zeros((1, F), jnp.float32),
            "w2": dense(lk[5], F, D), "b2": jnp.zeros((1, D), jnp.float32),
            "ln2_g": jnp.ones((1, D), jnp.float32), "ln2_b": jnp.zeros((1, D), jnp.float32),
        })
    # Final projection: pad vocab up to a multiple of 128 for lane-dense stores.
    vp = ((vocab_size + 127) // 128) * 128
    w_out = dense(keys[1], D, vocab_size)
    params["w_out_pad"] = jnp.zeros((D, vp), jnp.bfloat16).at[:, :vocab_size].set(w_out)
    params["b_out_pad"] = jnp.zeros((1, vp), jnp.float32)
    return params


def decoder_forward(params, tokens, num_heads):
    B, S = tokens.shape
    D = params["embed"].shape[1]
    vocab = params["vocab_size"]

    # TODO(synk): the token-embedding gather is data-dependent; it stays in plain
    # JAX (XLA fuses the gather with the sqrt(D) scale and the PE add).
    x = jnp.take(params["embed"], tokens, axis=0) * math.sqrt(D) + params["pe"][:S][None]

    for lp in params["layers"]:
        x = pallas_decoder_block(x, lp, num_heads)

    logits = pallas_linear(x.reshape(B * S, D),
                           params["w_out_pad"], params["b_out_pad"])
    return logits[:, :vocab].reshape(B, S, vocab)


# ---------------------------------- main -------------------------------------

if __name__ == "__main__":
    vocab_size, embed_dim, num_layers, num_heads, ff_dim = 50, 32, 2, 4, 64
    max_len = 128
    B, S = 2, 8

    key = jax.random.PRNGKey(0)
    pkey, tkey = jax.random.split(key)
    params = init_params(pkey, vocab_size, embed_dim, num_layers, num_heads,
                         ff_dim, max_len)
    tokens = jax.random.randint(tkey, (B, S), 0, vocab_size, dtype=jnp.int32)

    logits = decoder_forward(params, tokens, num_heads)
    logits = jax.block_until_ready(logits)
    assert logits.shape == (B, S, vocab_size)
    assert bool(jnp.all(jnp.isfinite(logits)))
    print("KERNEL_OK")
</pallas_src>

<mosaic_0001>
module attributes {stable_mosaic.version = 11 : i64} {
  func.func @_decoder_block_kernel(%arg0: i32, %arg1: memref<1x8x32xf32, #tpu.memory_space<vmem>>, %arg2: memref<32x96xbf16, #tpu.memory_space<vmem>>, %arg3: memref<1x96xf32, #tpu.memory_space<vmem>>, %arg4: memref<32x32xbf16, #tpu.memory_space<vmem>>, %arg5: memref<1x32xf32, #tpu.memory_space<vmem>>, %arg6: memref<1x32xf32, #tpu.memory_space<vmem>>, %arg7: memref<1x32xf32, #tpu.memory_space<vmem>>, %arg8: memref<32x64xbf16, #tpu.memory_space<vmem>>, %arg9: memref<1x64xf32, #tpu.memory_space<vmem>>, %arg10: memref<64x32xbf16, #tpu.memory_space<vmem>>, %arg11: memref<1x32xf32, #tpu.memory_space<vmem>>, %arg12: memref<1x32xf32, #tpu.memory_space<vmem>>, %arg13: memref<1x32xf32, #tpu.memory_space<vmem>>, %arg14: memref<1x8x32xf32, #tpu.memory_space<vmem>>) attributes {dimension_semantics = [#tpu.dimension_semantics<parallel>], iteration_bounds = array<i64: 2>, scalar_prefetch = 0 : i64, scratch_operands = 0 : i64, tpu.core_type = #tpu.core_type<tc>, window_params = [{transform_indices = @transform_0, window_bounds = array<i64: 1, 8, 32>}, {pipeline_mode = #tpu.pipeline_mode<synchronous>, transform_indices = @transform_1, window_bounds = array<i64: 32, 96>}, {pipeline_mode = #tpu.pipeline_mode<synchronous>, transform_indices = @transform_2, window_bounds = array<i64: 1, 96>}, {pipeline_mode = #tpu.pipeline_mode<synchronous>, transform_indices = @transform_3, window_bounds = array<i64: 32, 32>}, {pipeline_mode = #tpu.pipeline_mode<synchronous>, transform_indices = @transform_4, window_bounds = array<i64: 1, 32>}, {pipeline_mode = #tpu.pipeline_mode<synchronous>, transform_indices = @transform_5, window_bounds = array<i64: 1, 32>}, {pipeline_mode = #tpu.pipeline_mode<synchronous>, transform_indices = @transform_6, window_bounds = array<i64: 1, 32>}, {pipeline_mode = #tpu.pipeline_mode<synchronous>, transform_indices = @transform_7, window_bounds = array<i64: 32, 64>}, {pipeline_mode = #tpu.pipeline_mode<synchronous>, transform_indices = @transform_8, window_bounds = array<i64: 1, 64>}, {pipeline_mode = #tpu.pipeline_mode<synchronous>, transform_indices = @transform_9, window_bounds = array<i64: 64, 32>}, {pipeline_mode = #tpu.pipeline_mode<synchronous>, transform_indices = @transform_10, window_bounds = array<i64: 1, 32>}, {pipeline_mode = #tpu.pipeline_mode<synchronous>, transform_indices = @transform_11, window_bounds = array<i64: 1, 32>}, {pipeline_mode = #tpu.pipeline_mode<synchronous>, transform_indices = @transform_12, window_bounds = array<i64: 1, 32>}, {transform_indices = @transform_13, window_bounds = array<i64: 1, 8, 32>}]} {
    %c0 = arith.constant 0 : index
    %c0_0 = arith.constant 0 : index
    %c0_1 = arith.constant 0 : index
    %0 = vector.load %arg1[%c0, %c0_0, %c0_1] : memref<1x8x32xf32, #tpu.memory_space<vmem>>, vector<1x8x32xf32>
    %1 = vector.shape_cast %0 : vector<1x8x32xf32> to vector<8x32xf32>
    %2 = arith.truncf %1 : vector<8x32xf32> to vector<8x32xbf16>
    %c0_2 = arith.constant 0 : index
    %c0_3 = arith.constant 0 : index
    %3 = vector.load %arg2[%c0_2, %c0_3] : memref<32x96xbf16, #tpu.memory_space<vmem>>, vector<32x96xbf16>
    %cst = arith.constant dense<0.000000e+00> : vector<8x96xf32>
    %4 = tpu.matmul %2, %3, %cst {dimension_numbers = #tpu.dot_dimension_numbers<[1], [0], [0], [1], [0, 0, 1, 1], [], []>} : vector<8x32xbf16>, vector<32x96xbf16>, vector<8x96xf32> -> vector<8x96xf32>
    %c0_4 = arith.constant 0 : index
    %c0_5 = arith.constant 0 : index
    %5 = vector.load %arg3[%c0_4, %c0_5] : memref<1x96xf32, #tpu.memory_space<vmem>>, vector<1x96xf32>
    %6 = vector.broadcast %5 : vector<1x96xf32> to vector<8x96xf32>
    %7 = arith.addf %4, %6 : vector<8x96xf32>
    %8 = tpu.iota {dimensions = array<i32: 0>} : vector<8x8xi32>
    %9 = tpu.iota {dimensions = array<i32: 1>} : vector<8x8xi32>
    %10 = arith.cmpi sle, %9, %8 : vector<8x8xi32>
    %cst_6 = arith.constant 0.000000e+00 : f32
    %cst_7 = arith.constant -1.000000e+09 : f32
    %11 = vector.broadcast %cst_6 : f32 to vector<8x8xf32>
    %12 = vector.broadcast %cst_7 : f32 to vector<8x8xf32>
    %13 = arith.select %10, %11, %12 : vector<8x8xi1>, vector<8x8xf32>
    %14 = vector.extract_strided_slice %7 {offsets = [0, 0], sizes = [8, 8], strides = [1, 1]} : vector<8x96xf32> to vector<8x8xf32>
    %cst_8 = arith.constant 0.353553385 : f32
    %15 = vector.broadcast %cst_8 : f32 to vector<8x8xf32>
    %16 = arith.mulf %14, %15 : vector<8x8xf32>
    %17 = arith.truncf %16 : vector<8x8xf32> to vector<8x8xbf16>
    %18 = vector.extract_strided_slice %7 {offsets = [0, 32], sizes = [8, 8], strides = [1, 1]} : vector<8x96xf32> to vector<8x8xf32>
    %19 = arith.truncf %18 : vector<8x8xf32> to vector<8x8xbf16>
    %20 = vector.extract_strided_slice %7 {offsets = [0, 64], sizes = [8, 8], strides = [1, 1]} : vector<8x96xf32> to vector<8x8xf32>
    %21 = arith.truncf %20 : vector<8x8xf32> to vector<8x8xbf16>
    %cst_9 = arith.constant dense<0.000000e+00> : vector<8x8xf32>
    %22 = tpu.matmul %17, %19, %cst_9 {dimension_numbers = #tpu.dot_dimension_numbers<[1], [1], [0], [0], [0, 0, 1, 0], [], []>} : vector<8x8xbf16>, vector<8x8xbf16>, vector<8x8xf32> -> vector<8x8xf32>
    %23 = arith.addf %22, %13 : vector<8x8xf32>
    %cst_10 = arith.constant dense<0xFF800000> : vector<8xf32>
    %24 = vector.multi_reduction <maximumf>, %23, %cst_10 [1] : vector<8x8xf32> to vector<8xf32>
    %25 = vector.shape_cast %24 : vector<8xf32> to vector<8x1xf32>
    %26 = vector.broadcast %25 : vector<8x1xf32> to vector<8x8xf32>
    %27 = arith.subf %23, %26 : vector<8x8xf32>
    %28 = math.exp %27 : vector<8x8xf32>
    %cst_11 = arith.constant dense<0.000000e+00> : vector<8xf32>
    %29 = vector.multi_reduction <add>, %28, %cst_11 [1] : vector<8x8xf32> to vector<8xf32>
    %30 = vector.shape_cast %29 : vector<8xf32> to vector<8x1xf32>
    %31 = tpu.reciprocal %30 {approx = true} : vector<8x1xf32> -> vector<8x1xf32>
    %32 = vector.broadcast %31 : vector<8x1xf32> to vector<8x8xf32>
    %33 = arith.mulf %28, %32 : vector<8x8xf32>
    %34 = arith.truncf %33 : vector<8x8xf32> to vector<8x8xbf16>
    %cst_12 = arith.constant dense<0.000000e+00> : vector<8x8xf32>
    %35 = tpu.matmul %34, %21, %cst_12 {dimension_numbers = #tpu.dot_dimension_numbers<[1], [0], [0], [1], [0, 0, 1, 1], [], []>} : vector<8x8xbf16>, vector<8x8xbf16>, vector<8x8xf32> -> vector<8x8xf32>
    %36 = vector.extract_strided_slice %7 {offsets = [0, 8], sizes = [8, 8], strides = [1, 1]} : vector<8x96xf32> to vector<8x8xf32>
    %cst_13 = arith.constant 0.353553385 : f32
    %37 = vector.broadcast %cst_13 : f32 to vector<8x8xf32>
    %38 = arith.mulf %36, %37 : vector<8x8xf32>
    %39 = arith.truncf %38 : vector<8x8xf32> to vector<8x8xbf16>
    %40 = vector.extract_strided_slice %7 {offsets = [0, 40], sizes = [8, 8], strides = [1, 1]} : vector<8x96xf32> to vector<8x8xf32>
    %41 = arith.truncf %40 : vector<8x8xf32> to vector<8x8xbf16>
    %42 = vector.extract_strided_slice %7 {offsets = [0, 72], sizes = [8, 8], strides = [1, 1]} : vector<8x96xf32> to vector<8x8xf32>
    %43 = arith.truncf %42 : vector<8x8xf32> to vector<8x8xbf16>
    %cst_14 = arith.constant dense<0.000000e+00> : vector<8x8xf32>
    %44 = tpu.matmul %39, %41, %cst_14 {dimension_numbers = #tpu.dot_dimension_numbers<[1], [1], [0], [0], [0, 0, 1, 0], [], []>} : vector<8x8xbf16>, vector<8x8xbf16>, vector<8x8xf32> -> vector<8x8xf32>
    %45 = arith.addf %44, %13 : vector<8x8xf32>
    %cst_15 = arith.constant dense<0xFF800000> : vector<8xf32>
    %46 = vector.multi_reduction <maximumf>, %45, %cst_15 [1] : vector<8x8xf32> to vector<8xf32>
    %47 = vector.shape_cast %46 : vector<8xf32> to vector<8x1xf32>
    %48 = vector.broadcast %47 : vector<8x1xf32> to vector<8x8xf32>
    %49 = arith.subf %45, %48 : vector<8x8xf32>
    %50 = math.exp %49 : vector<8x8xf32>
    %cst_16 = arith.constant dense<0.000000e+00> : vector<8xf32>
    %51 = vector.multi_reduction <add>, %50, %cst_16 [1] : vector<8x8xf32> to vector<8xf32>
    %52 = vector.shape_cast %51 : vector<8xf32> to vector<8x1xf32>
    %53 = tpu.reciprocal %52 {approx = true} : vector<8x1xf32> -> vector<8x1xf32>
    %54 = vector.broadcast %53 : vector<8x1xf32> to vector<8x8xf32>
    %55 = arith.mulf %50, %54 : vector<8x8xf32>
    %56 = arith.truncf %55 : vector<8x8xf32> to vector<8x8xbf16>
    %cst_17 = arith.constant dense<0.000000e+00> : vector<8x8xf32>
    %57 = tpu.matmul %56, %43, %cst_17 {dimension_numbers = #tpu.dot_dimension_numbers<[1], [0], [0], [1], [0, 0, 1, 1], [], []>} : vector<8x8xbf16>, vector<8x8xbf16>, vector<8x8xf32> -> vector<8x8xf32>
    %58 = vector.extract_strided_slice %7 {offsets = [0, 16], sizes = [8, 8], strides = [1, 1]} : vector<8x96xf32> to vector<8x8xf32>
    %cst_18 = arith.constant 0.353553385 : f32
    %59 = vector.broadcast %cst_18 : f32 to vector<8x8xf32>
    %60 = arith.mulf %58, %59 : vector<8x8xf32>
    %61 = arith.truncf %60 : vector<8x8xf32> to vector<8x8xbf16>
    %62 = vector.extract_strided_slice %7 {offsets = [0, 48], sizes = [8, 8], strides = [1, 1]} : vector<8x96xf32> to vector<8x8xf32>
    %63 = arith.truncf %62 : vector<8x8xf32> to vector<8x8xbf16>
    %64 = vector.extract_strided_slice %7 {offsets = [0, 80], sizes = [8, 8], strides = [1, 1]} : vector<8x96xf32> to vector<8x8xf32>
    %65 = arith.truncf %64 : vector<8x8xf32> to vector<8x8xbf16>
    %cst_19 = arith.constant dense<0.000000e+00> : vector<8x8xf32>
    %66 = tpu.matmul %61, %63, %cst_19 {dimension_numbers = #tpu.dot_dimension_numbers<[1], [1], [0], [0], [0, 0, 1, 0], [], []>} : vector<8x8xbf16>, vector<8x8xbf16>, vector<8x8xf32> -> vector<8x8xf32>
    %67 = arith.addf %66, %13 : vector<8x8xf32>
    %cst_20 = arith.constant dense<0xFF800000> : vector<8xf32>
    %68 = vector.multi_reduction <maximumf>, %67, %cst_20 [1] : vector<8x8xf32> to vector<8xf32>
    %69 = vector.shape_cast %68 : vector<8xf32> to vector<8x1xf32>
    %70 = vector.broadcast %69 : vector<8x1xf32> to vector<8x8xf32>
    %71 = arith.subf %67, %70 : vector<8x8xf32>
    %72 = math.exp %71 : vector<8x8xf32>
    %cst_21 = arith.constant dense<0.000000e+00> : vector<8xf32>
    %73 = vector.multi_reduction <add>, %72, %cst_21 [1] : vector<8x8xf32> to vector<8xf32>
    %74 = vector.shape_cast %73 : vector<8xf32> to vector<8x1xf32>
    %75 = tpu.reciprocal %74 {approx = true} : vector<8x1xf32> -> vector<8x1xf32>
    %76 = vector.broadcast %75 : vector<8x1xf32> to vector<8x8xf32>
    %77 = arith.mulf %72, %76 : vector<8x8xf32>
    %78 = arith.truncf %77 : vector<8x8xf32> to vector<8x8xbf16>
    %cst_22 = arith.constant dense<0.000000e+00> : vector<8x8xf32>
    %79 = tpu.matmul %78, %65, %cst_22 {dimension_numbers = #tpu.dot_dimension_numbers<[1], [0], [0], [1], [0, 0, 1, 1], [], []>} : vector<8x8xbf16>, vector<8x8xbf16>, vector<8x8xf32> -> vector<8x8xf32>
    %80 = vector.extract_strided_slice %7 {offsets = [0, 24], sizes = [8, 8], strides = [1, 1]} : vector<8x96xf32> to vector<8x8xf32>
    %cst_23 = arith.constant 0.353553385 : f32
    %81 = vector.broadcast %cst_23 : f32 to vector<8x8xf32>
    %82 = arith.mulf %80, %81 : vector<8x8xf32>
    %83 = arith.truncf %82 : vector<8x8xf32> to vector<8x8xbf16>
    %84 = vector.extract_strided_slice %7 {offsets = [0, 56], sizes = [8, 8], strides = [1, 1]} : vector<8x96xf32> to vector<8x8xf32>
    %85 = arith.truncf %84 : vector<8x8xf32> to vector<8x8xbf16>
    %86 = vector.extract_strided_slice %7 {offsets = [0, 88], sizes = [8, 8], strides = [1, 1]} : vector<8x96xf32> to vector<8x8xf32>
    %87 = arith.truncf %86 : vector<8x8xf32> to vector<8x8xbf16>
    %cst_24 = arith.constant dense<0.000000e+00> : vector<8x8xf32>
    %88 = tpu.matmul %83, %85, %cst_24 {dimension_numbers = #tpu.dot_dimension_numbers<[1], [1], [0], [0], [0, 0, 1, 0], [], []>} : vector<8x8xbf16>, vector<8x8xbf16>, vector<8x8xf32> -> vector<8x8xf32>
    %89 = arith.addf %88, %13 : vector<8x8xf32>
    %cst_25 = arith.constant dense<0xFF800000> : vector<8xf32>
    %90 = vector.multi_reduction <maximumf>, %89, %cst_25 [1] : vector<8x8xf32> to vector<8xf32>
    %91 = vector.shape_cast %90 : vector<8xf32> to vector<8x1xf32>
    %92 = vector.broadcast %91 : vector<8x1xf32> to vector<8x8xf32>
    %93 = arith.subf %89, %92 : vector<8x8xf32>
    %94 = math.exp %93 : vector<8x8xf32>
    %cst_26 = arith.constant dense<0.000000e+00> : vector<8xf32>
    %95 = vector.multi_reduction <add>, %94, %cst_26 [1] : vector<8x8xf32> to vector<8xf32>
    %96 = vector.shape_cast %95 : vector<8xf32> to vector<8x1xf32>
    %97 = tpu.reciprocal %96 {approx = true} : vector<8x1xf32> -> vector<8x1xf32>
    %98 = vector.broadcast %97 : vector<8x1xf32> to vector<8x8xf32>
    %99 = arith.mulf %94, %98 : vector<8x8xf32>
    %100 = arith.truncf %99 : vector<8x8xf32> to vector<8x8xbf16>
    %cst_27 = arith.constant dense<0.000000e+00> : vector<8x8xf32>
    %101 = tpu.matmul %100, %87, %cst_27 {dimension_numbers = #tpu.dot_dimension_numbers<[1], [0], [0], [1], [0, 0, 1, 1], [], []>} : vector<8x8xbf16>, vector<8x8xbf16>, vector<8x8xf32> -> vector<8x8xf32>
    %102 = tpu.concatenate %35, %57, %79, %101 in 1 : vector<8x8xf32>, vector<8x8xf32>, vector<8x8xf32>, vector<8x8xf32> -> vector<8x32xf32>
    %103 = arith.truncf %102 : vector<8x32xf32> to vector<8x32xbf16>
    %c0_28 = arith.constant 0 : index
    %c0_29 = arith.constant 0 : index
    %104 = vector.load %arg4[%c0_28, %c0_29] : memref<32x32xbf16, #tpu.memory_space<vmem>>, vector<32x32xbf16>
    %cst_30 = arith.constant dense<0.000000e+00> : vector<8x32xf32>
    %105 = tpu.matmul %103, %104, %cst_30 {dimension_numbers = #tpu.dot_dimension_numbers<[1], [0], [0], [1], [0, 0, 1, 1], [], []>} : vector<8x32xbf16>, vector<32x32xbf16>, vector<8x32xf32> -> vector<8x32xf32>
    %c0_31 = arith.constant 0 : index
    %c0_32 = arith.constant 0 : index
    %106 = vector.load %arg5[%c0_31, %c0_32] : memref<1x32xf32, #tpu.memory_space<vmem>>, vector<1x32xf32>
    %107 = vector.broadcast %106 : vector<1x32xf32> to vector<8x32xf32>
    %108 = arith.addf %105, %107 : vector<8x32xf32>
    %109 = arith.addf %1, %108 : vector<8x32xf32>
    %c0_33 = arith.constant 0 : index
    %c0_34 = arith.constant 0 : index
    %110 = vector.load %arg6[%c0_33, %c0_34] : memref<1x32xf32, #tpu.memory_space<vmem>>, vector<1x32xf32>
    %c0_35 = arith.constant 0 : index
    %c0_36 = arith.constant 0 : index
    %111 = vector.load %arg7[%c0_35, %c0_36] : memref<1x32xf32, #tpu.memory_space<vmem>>, vector<1x32xf32>
    %cst_37 = arith.constant dense<0.000000e+00> : vector<8xf32>
    %112 = vector.multi_reduction <add>, %109, %cst_37 [1] : vector<8x32xf32> to vector<8xf32>
    %113 = vector.shape_cast %112 : vector<8xf32> to vector<8x1xf32>
    %cst_38 = arith.constant 3.200000e+01 : f32
    %114 = vector.broadcast %cst_38 : f32 to vector<8x1xf32>
    %115 = arith.divf %113, %114 : vector<8x1xf32>
    %116 = vector.broadcast %115 : vector<8x1xf32> to vector<8x32xf32>
    %117 = arith.subf %109, %116 : vector<8x32xf32>
    %118 = arith.mulf %117, %117 : vector<8x32xf32>
    %cst_39 = arith.constant dense<0.000000e+00> : vector<8xf32>
    %119 = vector.multi_reduction <add>, %118, %cst_39 [1] : vector<8x32xf32> to vector<8xf32>
    %120 = vector.shape_cast %119 : vector<8xf32> to vector<8x1xf32>
    %cst_40 = arith.constant 3.200000e+01 : f32
    %121 = vector.broadcast %cst_40 : f32 to vector<8x1xf32>
    %122 = arith.divf %120, %121 : vector<8x1xf32>
    %123 = vector.broadcast %115 : vector<8x1xf32> to vector<8x32xf32>
    %124 = arith.subf %109, %123 : vector<8x32xf32>
    %cst_41 = arith.constant 9.99999974E-6 : f32
    %125 = vector.broadcast %cst_41 : f32 to vector<8x1xf32>
    %126 = arith.addf %122, %125 : vector<8x1xf32>
    %127 = math.rsqrt %126 : vector<8x1xf32>
    %128 = vector.broadcast %127 : vector<8x1xf32> to vector<8x32xf32>
    %129 = arith.mulf %124, %128 : vector<8x32xf32>
    %130 = vector.broadcast %110 : vector<1x32xf32> to vector<8x32xf32>
    %131 = arith.mulf %129, %130 : vector<8x32xf32>
    %132 = vector.broadcast %111 : vector<1x32xf32> to vector<8x32xf32>
    %133 = arith.addf %131, %132 : vector<8x32xf32>
    %134 = arith.truncf %133 : vector<8x32xf32> to vector<8x32xbf16>
    %c0_42 = arith.constant 0 : index
    %c0_43 = arith.constant 0 : index
    %135 = vector.load %arg8[%c0_42, %c0_43] : memref<32x64xbf16, #tpu.memory_space<vmem>>, vector<32x64xbf16>
    %cst_44 = arith.constant dense<0.000000e+00> : vector<8x64xf32>
    %136 = tpu.matmul %134, %135, %cst_44 {dimension_numbers = #tpu.dot_dimension_numbers<[1], [0], [0], [1], [0, 0, 1, 1], [], []>} : vector<8x32xbf16>, vector<32x64xbf16>, vector<8x64xf32> -> vector<8x64xf32>
    %c0_45 = arith.constant 0 : index
    %c0_46 = arith.constant 0 : index
    %137 = vector.load %arg9[%c0_45, %c0_46] : memref<1x64xf32, #tpu.memory_space<vmem>>, vector<1x64xf32>
    %138 = vector.broadcast %137 : vector<1x64xf32> to vector<8x64xf32>
    %139 = arith.addf %136, %138 : vector<8x64xf32>
    %cst_47 = arith.constant 0.000000e+00 : f32
    %140 = vector.broadcast %cst_47 : f32 to vector<8x64xf32>
    %141 = arith.maximumf %139, %140 : vector<8x64xf32>
    %142 = arith.truncf %141 : vector<8x64xf32> to vector<8x64xbf16>
    %c0_48 = arith.constant 0 : index
    %c0_49 = arith.constant 0 : index
    %143 = vector.load %arg10[%c0_48, %c0_49] : memref<64x32xbf16, #tpu.memory_space<vmem>>, vector<64x32xbf16>
    %cst_50 = arith.constant dense<0.000000e+00> : vector<8x32xf32>
    %144 = tpu.matmul %142, %143, %cst_50 {dimension_numbers = #tpu.dot_dimension_numbers<[1], [0], [0], [1], [0, 0, 1, 1], [], []>} : vector<8x64xbf16>, vector<64x32xbf16>, vector<8x32xf32> -> vector<8x32xf32>
    %c0_51 = arith.constant 0 : index
    %c0_52 = arith.constant 0 : index
    %145 = vector.load %arg11[%c0_51, %c0_52] : memref<1x32xf32, #tpu.memory_space<vmem>>, vector<1x32xf32>
    %146 = vector.broadcast %145 : vector<1x32xf32> to vector<8x32xf32>
    %147 = arith.addf %144, %146 : vector<8x32xf32>
    %148 = arith.addf %133, %147 : vector<8x32xf32>
    %c0_53 = arith.constant 0 : index
    %c0_54 = arith.constant 0 : index
    %149 = vector.load %arg12[%c0_53, %c0_54] : memref<1x32xf32, #tpu.memory_space<vmem>>, vector<1x32xf32>
    %c0_55 = arith.constant 0 : index
    %c0_56 = arith.constant 0 : index
    %150 = vector.load %arg13[%c0_55, %c0_56] : memref<1x32xf32, #tpu.memory_space<vmem>>, vector<1x32xf32>
    %cst_57 = arith.constant dense<0.000000e+00> : vector<8xf32>
    %151 = vector.multi_reduction <add>, %148, %cst_57 [1] : vector<8x32xf32> to vector<8xf32>
    %152 = vector.shape_cast %151 : vector<8xf32> to vector<8x1xf32>
    %cst_58 = arith.constant 3.200000e+01 : f32
    %153 = vector.broadcast %cst_58 : f32 to vector<8x1xf32>
    %154 = arith.divf %152, %153 : vector<8x1xf32>
    %155 = vector.broadcast %154 : vector<8x1xf32> to vector<8x32xf32>
    %156 = arith.subf %148, %155 : vector<8x32xf32>
    %157 = arith.mulf %156, %156 : vector<8x32xf32>
    %cst_59 = arith.constant dense<0.000000e+00> : vector<8xf32>
    %158 = vector.multi_reduction <add>, %157, %cst_59 [1] : vector<8x32xf32> to vector<8xf32>
    %159 = vector.shape_cast %158 : vector<8xf32> to vector<8x1xf32>
    %cst_60 = arith.constant 3.200000e+01 : f32
    %160 = vector.broadcast %cst_60 : f32 to vector<8x1xf32>
    %161 = arith.divf %159, %160 : vector<8x1xf32>
    %162 = vector.broadcast %154 : vector<8x1xf32> to vector<8x32xf32>
    %163 = arith.subf %148, %162 : vector<8x32xf32>
    %cst_61 = arith.constant 9.99999974E-6 : f32
    %164 = vector.broadcast %cst_61 : f32 to vector<8x1xf32>
    %165 = arith.addf %161, %164 : vector<8x1xf32>
    %166 = math.rsqrt %165 : vector<8x1xf32>
    %167 = vector.broadcast %166 : vector<8x1xf32> to vector<8x32xf32>
    %168 = arith.mulf %163, %167 : vector<8x32xf32>
    %169 = vector.broadcast %149 : vector<1x32xf32> to vector<8x32xf32>
    %170 = arith.mulf %168, %169 : vector<8x32xf32>
    %171 = vector.broadcast %150 : vector<1x32xf32> to vector<8x32xf32>
    %172 = arith.addf %170, %171 : vector<8x32xf32>
    %c0_62 = arith.constant 0 : index
    %c0_63 = arith.constant 0 : index
    %c0_64 = arith.constant 0 : index
    %173 = vector.load %arg14[%c0_62, %c0_63, %c0_64] : memref<1x8x32xf32, #tpu.memory_space<vmem>>, vector<1x8x32xf32>
    %174 = vector.shape_cast %173 : vector<1x8x32xf32> to vector<8x32xf32>
    %175 = vector.shape_cast %172 : vector<8x32xf32> to vector<1x8x32xf32>
    tpu.vector_store %arg14[%c0_62, %c0_63, %c0_64], %175 {strides = array<i32>} : memref<1x8x32xf32, #tpu.memory_space<vmem>>, vector<1x8x32xf32>,
    return
  }
  func.func @transform_0(%arg0: i32) -> (i32, i32, i32) {
    %c0_i32 = arith.constant 0 : i32
    %c0_i32_0 = arith.constant 0 : i32
    %c0_i32_1 = arith.constant 0 : i32
    return %arg0, %c0_i32, %c0_i32_0 : i32, i32, i32
  }
  func.func @transform_1(%arg0: i32) -> (i32, i32) {
    %c0_i32 = arith.constant 0 : i32
    %c0_i32_0 = arith.constant 0 : i32
    %c0_i32_1 = arith.constant 0 : i32
    return %c0_i32, %c0_i32_0 : i32, i32
  }
  func.func @transform_2(%arg0: i32) -> (i32, i32) {
    %c0_i32 = arith.constant 0 : i32
    %c0_i32_0 = arith.constant 0 : i32
    %c0_i32_1 = arith.constant 0 : i32
    return %c0_i32, %c0_i32_0 : i32, i32
  }
  func.func @transform_3(%arg0: i32) -> (i32, i32) {
    %c0_i32 = arith.constant 0 : i32
    %c0_i32_0 = arith.constant 0 : i32
    %c0_i32_1 = arith.constant 0 : i32
    return %c0_i32, %c0_i32_0 : i32, i32
  }
  func.func @transform_4(%arg0: i32) -> (i32, i32) {
    %c0_i32 = arith.constant 0 : i32
    %c0_i32_0 = arith.constant 0 : i32
    %c0_i32_1 = arith.constant 0 : i32
    return %c0_i32, %c0_i32_0 : i32, i32
  }
  func.func @transform_5(%arg0: i32) -> (i32, i32) {
    %c0_i32 = arith.constant 0 : i32
    %c0_i32_0 = arith.constant 0 : i32
    %c0_i32_1 = arith.constant 0 : i32
    return %c0_i32, %c0_i32_0 : i32, i32
  }
  func.func @transform_6(%arg0: i32) -> (i32, i32) {
    %c0_i32 = arith.constant 0 : i32
    %c0_i32_0 = arith.constant 0 : i32
    %c0_i32_1 = arith.constant 0 : i32
    return %c0_i32, %c0_i32_0 : i32, i32
  }
  func.func @transform_7(%arg0: i32) -> (i32, i32) {
    %c0_i32 = arith.constant 0 : i32
    %c0_i32_0 = arith.constant 0 : i32
    %c0_i32_1 = arith.constant 0 : i32
    return %c0_i32, %c0_i32_0 : i32, i32
  }
  func.func @transform_8(%arg0: i32) -> (i32, i32) {
    %c0_i32 = arith.constant 0 : i32
    %c0_i32_0 = arith.constant 0 : i32
    %c0_i32_1 = arith.constant 0 : i32
    return %c0_i32, %c0_i32_0 : i32, i32
  }
  func.func @transform_9(%arg0: i32) -> (i32, i32) {
    %c0_i32 = arith.constant 0 : i32
    %c0_i32_0 = arith.constant 0 : i32
    %c0_i32_1 = arith.constant 0 : i32
    return %c0_i32, %c0_i32_0 : i32, i32
  }
  func.func @transform_10(%arg0: i32) -> (i32, i32) {
    %c0_i32 = arith.constant 0 : i32
    %c0_i32_0 = arith.constant 0 : i32
    %c0_i32_1 = arith.constant 0 : i32
    return %c0_i32, %c0_i32_0 : i32, i32
  }
  func.func @transform_11(%arg0: i32) -> (i32, i32) {
    %c0_i32 = arith.constant 0 : i32
    %c0_i32_0 = arith.constant 0 : i32
    %c0_i32_1 = arith.constant 0 : i32
    return %c0_i32, %c0_i32_0 : i32, i32
  }
  func.func @transform_12(%arg0: i32) -> (i32, i32) {
    %c0_i32 = arith.constant 0 : i32
    %c0_i32_0 = arith.constant 0 : i32
    %c0_i32_1 = arith.constant 0 : i32
    return %c0_i32, %c0_i32_0 : i32, i32
  }
  func.func @transform_13(%arg0: i32) -> (i32, i32, i32) {
    %c0_i32 = arith.constant 0 : i32
    %c0_i32_0 = arith.constant 0 : i32
    %c0_i32_1 = arith.constant 0 : i32
    return %arg0, %c0_i32, %c0_i32_0 : i32, i32, i32
  }
}

</mosaic_0001>

<llo_original>
// kernel: tpu_custom_call.1
$region0: #{tpu_custom_call.1}
  #allocation0 [shape = 'u32[]', space=smem, size = 0x4, offset = 0x4, fixed_abs, tag = 'smem constant byte address 0x4 - core index']
  #allocation1 [shape = 'u32[144,128]{1,0:T(1,128)}', space=vmem, size = 0x12000, scoped, tag = 'internal scratch']
  %s0 = inlined_call_operand.vmem [shape: f32[2,8,32], index: 0, kind: input, shape index: {}]
  %s1 = inlined_call_operand.vmem [shape: bf16[32,96], index: 1, kind: input, shape index: {}]
  %s2 = inlined_call_operand.vmem [shape: f32[1,96], index: 2, kind: input, shape index: {}]
  %s3 = inlined_call_operand.vmem [shape: bf16[32,32], index: 3, kind: input, shape index: {}]
  %s4 = inlined_call_operand.vmem [shape: f32[1,32], index: 4, kind: input, shape index: {}]
  %s5 = inlined_call_operand.vmem [shape: f32[1,32], index: 5, kind: input, shape index: {}]
  %s6 = inlined_call_operand.vmem [shape: f32[1,32], index: 6, kind: input, shape index: {}]
  %s7 = inlined_call_operand.hbm [shape: bf16[32,64], index: 7, kind: input, shape index: {}]
  %s8 = inlined_call_operand.vmem [shape: f32[1,64], index: 8, kind: input, shape index: {}]
  %s9 = inlined_call_operand.vmem [shape: bf16[64,32], index: 9, kind: input, shape index: {}]
  %s10 = inlined_call_operand.vmem [shape: f32[1,32], index: 10, kind: input, shape index: {}]
  %s11 = inlined_call_operand.vmem [shape: f32[1,32], index: 11, kind: input, shape index: {}]
  %s12 = inlined_call_operand.vmem [shape: f32[1,32], index: 12, kind: input, shape index: {}]
  %s13 = inlined_call_operand.hbm [shape: f32[2,8,32], index: 13, kind: output, shape index: {}]
  %s14 = sld [smem:[#allocation0]]
  $region89: #{tpu_custom_call.1} parent=0
    _
  %s16 = ssub.s32 1, %s14
  %s17 = scalar_select 0, %s16, %s14
  $region1: #{tpu_custom_call.1} parent=0
    #allocation2 [shape = 'u8[8192]{0}', space=vmem, size = 0x2000, scoped, tag = 'input window, operand 7, single buffered']
    #allocation3 [shape = 's32[2]{0}', space=sflag, size = 0x8, scoped, tag = 'scoped memory for tpu_custom_call.1']
    #allocation4 [shape = 's32[2]{0}', space=sflag, size = 0x8, scoped, tag = 'scoped memory for tpu_custom_call.1']
    #allocation5 [shape = 'u8[8192]{0}', space=vmem, size = 0x2000, scoped, tag = 'output window, operand 0']
    %18 = vsyncpa [#allocation3], 0
    %19 = vsyncpa [#allocation4], 0
    %s20 = scalar_lea.sflag [#allocation4], 1
    %21 = vsyncpa %s20, 0
    loop: start=0, step=1, limit=4
    $region2: #{tpu_custom_call.1} parent=1 // loop_pre_header
      _
    $region3: #{tpu_custom_call.1} parent=1 // loop_header
      %s23 = sphi 0, %s27
      %p24 = scmp.ge.s32.totalorder %s23, 4
      %s33 = sphi 0, %s35
      %s36 = sphi 0, %s33
      %s37 = sphi 0, %s36
      %s53 = sphi 0, %s37
      %s57 = sphi 0, %s57
      %s59 = sphi 0, %s57
      %s60 = sphi 0, %s59
      %s74 = sphi 0, %s60
      %s78 = sphi 0, %s78
      %s80 = sphi 0, %s78
      %s81 = sphi 0, %s80
      %s95 = sphi 0, %s81
      %s99 = sphi 0, %s99
      %s101 = sphi 0, %s99
      %s102 = sphi 0, %s101
      %s116 = sphi 0, %s102
      %s120 = sphi 0, %s120
      %s122 = sphi 0, %s120
      %s123 = sphi 0, %s122
      %s137 = sphi 0, %s123
      %s141 = sphi 0, %s141
      %s143 = sphi 0, %s141
      %s144 = sphi 0, %s143
      %s158 = sphi 0, %s144
      %s162 = sphi 0, %s162
      %s164 = sphi 0, %s162
      %s165 = sphi 0, %s164
      %s179 = sphi 0, %s165
      %s183 = sphi 0, %s183
      %s185 = sphi 0, %s183
      %s186 = sphi 0, %s185
      %s200 = sphi 0, %s186
      %s204 = sphi 0, %s204
      %s206 = sphi 0, %s204
      %s207 = sphi 0, %s206
      %s221 = sphi 0, %s207
      %s225 = sphi 0, %s225
      %s227 = sphi 0, %s225
      %s228 = sphi 0, %s227
      %s242 = sphi 0, %s228
      %s246 = sphi 0, %s246
      %s248 = sphi 0, %s246
      %s249 = sphi 0, %s248
      %s263 = sphi 0, %s249
      %s267 = sphi 0, %s267
      %s269 = sphi 0, %s267
      %s270 = sphi 0, %s269
      %s284 = sphi 0, %s270
      %s288 = sphi 0, %s288
      %s290 = sphi 0, %s288
      %s291 = sphi 0, %s290
      %s305 = sphi 0, %s291
      %s311 = sphi 0, %s313
      %s314 = sphi 0, %s311
      %s315 = sphi 0, %s314
      %s331 = sphi 0, %s315
    $region4: #{tpu_custom_call.1} parent=1 // loop_header_branch
      %26 = sbr.rel (%p24) target = $region8
    $region5: #{tpu_custom_call.1} parent=1 // loop_body
      %s28 = ssub.s32 %s23, 1
      %s29 = ssub.s32 %s23, 2
      %s30 = sadd.s32 %s23, 1
      %s31 = ssub.s32 %s23, %s30
      %p32 = scmp.eq.s32.totalorder %s31, 0
      %s34 = sadd.s32 %s33, 1
      %s35 = scalar_select %p32, %s33, %s34
      %p38 = pneg %p32
      %p39 = scmp.eq.s32.totalorder %s23, 1
      %p40 = por %p38, %p39
      %p41 = scmp.ne.s32.totalorder %s33, %s36
      %p42 = scmp.eq.s32.totalorder %s23, 0
      %p43 = por %p41, %p42
      %p44 = scmp.ne.s32.totalorder %s33, %s36
      %p45 = scmp.eq.s32.totalorder %s28, 1
      %p46 = por %p44, %p45
      %p47 = scmp.ne.s32.totalorder %s36, %s37
      %p48 = scmp.eq.s32.totalorder %s28, 0
      %p49 = por %p47, %p48
      %p50 = scmp.ne.s32.totalorder %s36, %s37
      %p51 = scmp.eq.s32.totalorder %s29, 1
      %p52 = por %p50, %p51
      %p54 = scmp.ne.s32.totalorder %s37, %s53
      %p55 = scmp.eq.s32.totalorder %s29, 0
      %p56 = por %p54, %p55
      %s58 = sadd.s32 %s57, 1
      %p61 = scmp.eq.s32.totalorder %s23, 1
      %p62 = scmp.ne.s32.totalorder %s57, %s59
      %p63 = scmp.eq.s32.totalorder %s23, 0
      %p64 = por %p62, %p63
      %p65 = scmp.ne.s32.totalorder %s57, %s59
      %p66 = scmp.eq.s32.totalorder %s28, 1
      %p67 = por %p65, %p66
      %p68 = scmp.ne.s32.totalorder %s59, %s60
      %p69 = scmp.eq.s32.totalorder %s28, 0
      %p70 = por %p68, %p69
      %p71 = scmp.ne.s32.totalorder %s59, %s60
      %p72 = scmp.eq.s32.totalorder %s29, 1
      %p73 = por %p71, %p72
      %p75 = scmp.ne.s32.totalorder %s60, %s74
      %p76 = scmp.eq.s32.totalorder %s29, 0
      %p77 = por %p75, %p76
      %s79 = sadd.s32 %s78, 1
      %p82 = scmp.eq.s32.totalorder %s23, 1
      %p83 = scmp.ne.s32.totalorder %s78, %s80
      %p84 = scmp.eq.s32.totalorder %s23, 0
      %p85 = por %p83, %p84
      %p86 = scmp.ne.s32.totalorder %s78, %s80
      %p87 = scmp.eq.s32.totalorder %s28, 1
      %p88 = por %p86, %p87
      %p89 = scmp.ne.s32.totalorder %s80, %s81
      %p90 = scmp.eq.s32.totalorder %s28, 0
      %p91 = por %p89, %p90
      %p92 = scmp.ne.s32.totalorder %s80, %s81
      %p93 = scmp.eq.s32.totalorder %s29, 1
      %p94 = por %p92, %p93
      %p96 = scmp.ne.s32.totalorder %s81, %s95
      %p97 = scmp.eq.s32.totalorder %s29, 0
      %p98 = por %p96, %p97
      %s100 = sadd.s32 %s99, 1
      %p103 = scmp.eq.s32.totalorder %s23, 1
      %p104 = scmp.ne.s32.totalorder %s99, %s101
      %p105 = scmp.eq.s32.totalorder %s23, 0
      %p106 = por %p104, %p105
      %p107 = scmp.ne.s32.totalorder %s99, %s101
      %p108 = scmp.eq.s32.totalorder %s28, 1
      %p109 = por %p107, %p108
      %p110 = scmp.ne.s32.totalorder %s101, %s102
      %p111 = scmp.eq.s32.totalorder %s28, 0
      %p112 = por %p110, %p111
      %p113 = scmp.ne.s32.totalorder %s101, %s102
      %p114 = scmp.eq.s32.totalorder %s29, 1
      %p115 = por %p113, %p114
      %p117 = scmp.ne.s32.totalorder %s102, %s116
      %p118 = scmp.eq.s32.totalorder %s29, 0
      %p119 = por %p117, %p118
      %s121 = sadd.s32 %s120, 1
      %p124 = scmp.eq.s32.totalorder %s23, 1
      %p125 = scmp.ne.s32.totalorder %s120, %s122
      %p126 = scmp.eq.s32.totalorder %s23, 0
      %p127 = por %p125, %p126
      %p128 = scmp.ne.s32.totalorder %s120, %s122
      %p129 = scmp.eq.s32.totalorder %s28, 1
      %p130 = por %p128, %p129
      %p131 = scmp.ne.s32.totalorder %s122, %s123
      %p132 = scmp.eq.s32.totalorder %s28, 0
      %p133 = por %p131, %p132
      %p134 = scmp.ne.s32.totalorder %s122, %s123
      %p135 = scmp.eq.s32.totalorder %s29, 1
      %p136 = por %p134, %p135
      %p138 = scmp.ne.s32.totalorder %s123, %s137
      %p139 = scmp.eq.s32.totalorder %s29, 0
      %p140 = por %p138, %p139
      %s142 = sadd.s32 %s141, 1
      %p145 = scmp.eq.s32.totalorder %s23, 1
      %p146 = scmp.ne.s32.totalorder %s141, %s143
      %p147 = scmp.eq.s32.totalorder %s23, 0
      %p148 = por %p146, %p147
      %p149 = scmp.ne.s32.totalorder %s141, %s143
      %p150 = scmp.eq.s32.totalorder %s28, 1
      %p151 = por %p149, %p150
      %p152 = scmp.ne.s32.totalorder %s143, %s144
      %p153 = scmp.eq.s32.totalorder %s28, 0
      %p154 = por %p152, %p153
      %p155 = scmp.ne.s32.totalorder %s143, %s144
      %p156 = scmp.eq.s32.totalorder %s29, 1
      %p157 = por %p155, %p156
      %p159 = scmp.ne.s32.totalorder %s144, %s158
      %p160 = scmp.eq.s32.totalorder %s29, 0
      %p161 = por %p159, %p160
      %s163 = sadd.s32 %s162, 1
      %p166 = scmp.eq.s32.totalorder %s23, 1
      %p167 = scmp.ne.s32.totalorder %s162, %s164
      %p168 = scmp.eq.s32.totalorder %s23, 0
      %p169 = por %p167, %p168
      %p170 = scmp.ne.s32.totalorder %s162, %s164
      %p171 = scmp.eq.s32.totalorder %s28, 1
      %p172 = por %p170, %p171
      %p173 = scmp.ne.s32.totalorder %s164, %s165
      %p174 = scmp.eq.s32.totalorder %s28, 0
      %p175 = por %p173, %p174
      %p176 = scmp.ne.s32.totalorder %s164, %s165
      %p177 = scmp.eq.s32.totalorder %s29, 1
      %p178 = por %p176, %p177
      %p180 = scmp.ne.s32.totalorder %s165, %s179
      %p181 = scmp.eq.s32.totalorder %s29, 0
      %p182 = por %p180, %p181
      %s184 = sadd.s32 %s183, 1
      %p187 = scmp.eq.s32.totalorder %s23, 1
      %p188 = scmp.ne.s32.totalorder %s183, %s185
      %p189 = scmp.eq.s32.totalorder %s23, 0
      %p190 = por %p188, %p189
      %p191 = scmp.ne.s32.totalorder %s183, %s185
      %p192 = scmp.eq.s32.totalorder %s28, 1
      %p193 = por %p191, %p192
      %p194 = scmp.ne.s32.totalorder %s185, %s186
      %p195 = scmp.eq.s32.totalorder %s28, 0
      %p196 = por %p194, %p195
      %p197 = scmp.ne.s32.totalorder %s185, %s186
      %p198 = scmp.eq.s32.totalorder %s29, 1
      %p199 = por %p197, %p198
      %p201 = scmp.ne.s32.totalorder %s186, %s200
      %p202 = scmp.eq.s32.totalorder %s29, 0
      %p203 = por %p201, %p202
      %s205 = sadd.s32 %s204, 1
      %p208 = scmp.eq.s32.totalorder %s23, 1
      %p209 = scmp.ne.s32.totalorder %s204, %s206
      %p210 = scmp.eq.s32.totalorder %s23, 0
      %p211 = por %p209, %p210
      %p212 = scmp.ne.s32.totalorder %s204, %s206
      %p213 = scmp.eq.s32.totalorder %s28, 1
      %p214 = por %p212, %p213
      %p215 = scmp.ne.s32.totalorder %s206, %s207
      %p216 = scmp.eq.s32.totalorder %s28, 0
      %p217 = por %p215, %p216
      %p218 = scmp.ne.s32.totalorder %s206, %s207
      %p219 = scmp.eq.s32.totalorder %s29, 1
      %p220 = por %p218, %p219
      %p222 = scmp.ne.s32.totalorder %s207, %s221
      %p223 = scmp.eq.s32.totalorder %s29, 0
      %p224 = por %p222, %p223
      %s226 = sadd.s32 %s225, 1
      %p229 = scmp.eq.s32.totalorder %s23, 1
      %p230 = scmp.ne.s32.totalorder %s225, %s227
      %p231 = scmp.eq.s32.totalorder %s23, 0
      %p232 = por %p230, %p231
      %p233 = scmp.ne.s32.totalorder %s225, %s227
      %p234 = scmp.eq.s32.totalorder %s28, 1
      %p235 = por %p233, %p234
      %p236 = scmp.ne.s32.totalorder %s227, %s228
      %p237 = scmp.eq.s32.totalorder %s28, 0
      %p238 = por %p236, %p237
      %p239 = scmp.ne.s32.totalorder %s227, %s228
      %p240 = scmp.eq.s32.totalorder %s29, 1
      %p241 = por %p239, %p240
      %p243 = scmp.ne.s32.totalorder %s228, %s242
      %p244 = scmp.eq.s32.totalorder %s29, 0
      %p245 = por %p243, %p244
      %s247 = sadd.s32 %s246, 1
      %p250 = scmp.eq.s32.totalorder %s23, 1
      %p251 = scmp.ne.s32.totalorder %s246, %s248
      %p252 = scmp.eq.s32.totalorder %s23, 0
      %p253 = por %p251, %p252
      %p254 = scmp.ne.s32.totalorder %s246, %s248
      %p255 = scmp.eq.s32.totalorder %s28, 1
      %p256 = por %p254, %p255
      %p257 = scmp.ne.s32.totalorder %s248, %s249
      %p258 = scmp.eq.s32.totalorder %s28, 0
      %p259 = por %p257, %p258
      %p260 = scmp.ne.s32.totalorder %s248, %s249
      %p261 = scmp.eq.s32.totalorder %s29, 1
      %p262 = por %p260, %p261
      %p264 = scmp.ne.s32.totalorder %s249, %s263
      %p265 = scmp.eq.s32.totalorder %s29, 0
      %p266 = por %p264, %p265
      %s268 = sadd.s32 %s267, 1
      %p271 = scmp.eq.s32.totalorder %s23, 1
      %p272 = scmp.ne.s32.totalorder %s267, %s269
      %p273 = scmp.eq.s32.totalorder %s23, 0
      %p274 = por %p272, %p273
      %p275 = scmp.ne.s32.totalorder %s267, %s269
      %p276 = scmp.eq.s32.totalorder %s28, 1
      %p277 = por %p275, %p276
      %p278 = scmp.ne.s32.totalorder %s269, %s270
      %p279 = scmp.eq.s32.totalorder %s28, 0
      %p280 = por %p278, %p279
      %p281 = scmp.ne.s32.totalorder %s269, %s270
      %p282 = scmp.eq.s32.totalorder %s29, 1
      %p283 = por %p281, %p282
      %p285 = scmp.ne.s32.totalorder %s270, %s284
      %p286 = scmp.eq.s32.totalorder %s29, 0
      %p287 = por %p285, %p286
      %s289 = sadd.s32 %s288, 1
      %p292 = scmp.eq.s32.totalorder %s23, 1
      %p293 = scmp.ne.s32.totalorder %s288, %s290
      %p294 = scmp.eq.s32.totalorder %s23, 0
      %p295 = por %p293, %p294
      %p296 = scmp.ne.s32.totalorder %s288, %s290
      %p297 = scmp.eq.s32.totalorder %s28, 1
      %p298 = por %p296, %p297
      %p299 = scmp.ne.s32.totalorder %s290, %s291
      %p300 = scmp.eq.s32.totalorder %s28, 0
      %p301 = por %p299, %p300
      %p302 = scmp.ne.s32.totalorder %s290, %s291
      %p303 = scmp.eq.s32.totalorder %s29, 1
      %p304 = por %p302, %p303
      %p306 = scmp.ne.s32.totalorder %s291, %s305
      %p307 = scmp.eq.s32.totalorder %s29, 0
      %p308 = por %p306, %p307
      %s309 = ssub.s32 %s23, %s30
      %p310 = scmp.eq.s32.totalorder %s309, 0
      %s312 = sadd.s32 %s311, 1
      %s313 = scalar_select %p310, %s311, %s312
      %p316 = pneg %p310
      %p317 = scmp.eq.s32.totalorder %s23, 1
      %p318 = por %p316, %p317
      %p319 = scmp.ne.s32.totalorder %s311, %s314
      %p320 = scmp.eq.s32.totalorder %s23, 0
      %p321 = por %p319, %p320
      %p322 = scmp.ne.s32.totalorder %s311, %s314
      %p323 = scmp.eq.s32.totalorder %s28, 1
      %p324 = por %p322, %p323
      %p325 = scmp.ne.s32.totalorder %s314, %s315
      %p326 = scmp.eq.s32.totalorder %s28, 0
      %p327 = por %p325, %p326
      %p328 = scmp.ne.s32.totalorder %s314, %s315
      %p329 = scmp.eq.s32.totalorder %s29, 1
      %p330 = por %p328, %p329
      %p332 = scmp.ne.s32.totalorder %s315, %s331
      %p333 = scmp.eq.s32.totalorder %s29, 0
      %p334 = por %p332, %p333
      %p335 = scmp.le.s32.totalorder 1, %s23
      %p336 = scmp.lt.s32.totalorder %s23, 3
      %p337 = pnand %p335, %p336
      %p338 = pneg %p337
      // Predicated region
      $region9: #{tpu_custom_call.1} parent=5 // pred_check
        _
      $region10: #{tpu_custom_call.1} parent=5 // pred_check_branch
        %340 = sbr.rel (%p337) target = $region12
      $region11: #{tpu_custom_call.1} parent=5 // pred_region
        %s341 = ssub.s32 %s23, 1
        // Predicated region
        $region13: #{tpu_custom_call.1} parent=11 // pred_check
          %p342 = pneg %p70
        $region14: #{tpu_custom_call.1} parent=11 // pred_check_branch
          %344 = sbr.rel (%p342) target = $region16
        $region15: #{tpu_custom_call.1} parent=11 // pred_region
          _
        $region16: #{tpu_custom_call.1} parent=11 // pred_fallthru
          _
        // Predicated region
        $region17: #{tpu_custom_call.1} parent=11 // pred_check
          %p345 = pneg %p91
        $region18: #{tpu_custom_call.1} parent=11 // pred_check_branch
          %347 = sbr.rel (%p345) target = $region20
        $region19: #{tpu_custom_call.1} parent=11 // pred_region
          _
        $region20: #{tpu_custom_call.1} parent=11 // pred_fallthru
          _
        // Predicated region
        $region21: #{tpu_custom_call.1} parent=11 // pred_check
          %p348 = pneg %p112
        $region22: #{tpu_custom_call.1} parent=11 // pred_check_branch
          %350 = sbr.rel (%p348) target = $region24
        $region23: #{tpu_custom_call.1} parent=11 // pred_region
          _
        $region24: #{tpu_custom_call.1} parent=11 // pred_fallthru
          _
        // Predicated region
        $region25: #{tpu_custom_call.1} parent=11 // pred_check
          %p351 = pneg %p133
        $region26: #{tpu_custom_call.1} parent=11 // pred_check_branch
          %353 = sbr.rel (%p351) target = $region28
        $region27: #{tpu_custom_call.1} parent=11 // pred_region
          _
        $region28: #{tpu_custom_call.1} parent=11 // pred_fallthru
          _
        // Predicated region
        $region29: #{tpu_custom_call.1} parent=11 // pred_check
          %p354 = pneg %p154
        $region30: #{tpu_custom_call.1} parent=11 // pred_check_branch
          %356 = sbr.rel (%p354) target = $region32
        $region31: #{tpu_custom_call.1} parent=11 // pred_region
          _
        $region32: #{tpu_custom_call.1} parent=11 // pred_fallthru
          _
        // Predicated region
        $region33: #{tpu_custom_call.1} parent=11 // pred_check
          %p357 = pneg %p175
        $region34: #{tpu_custom_call.1} parent=11 // pred_check_branch
          %359 = sbr.rel (%p357) target = $region36
        $region35: #{tpu_custom_call.1} parent=11 // pred_region
          _
        $region36: #{tpu_custom_call.1} parent=11 // pred_fallthru
          _
        // Predicated region
        $region37: #{tpu_custom_call.1} parent=11 // pred_check
          %p360 = pneg %p196
        $region38: #{tpu_custom_call.1} parent=11 // pred_check_branch
          %362 = sbr.rel (%p360) target = $region40
        $region39: #{tpu_custom_call.1} parent=11 // pred_region
          %s364 = ssub.s32 256, 256
          %365 = vsyncadd [#allocation3], %s364
          %s366 = sshll.u32 [#allocation2], 4
          %s367 = int_to_ptr.vmem [resolvable:$true] %s366
          %372 = dma.hbm_to_vmem [thread:$0]  %s7, 256, %s367, [#allocation3], 64, 64, 4
        $region40: #{tpu_custom_call.1} parent=11 // pred_fallthru
          _
        // Predicated region
        $region41: #{tpu_custom_call.1} parent=11 // pred_check
          %p373 = pneg %p217
        $region42: #{tpu_custom_call.1} parent=11 // pred_check_branch
          %375 = sbr.rel (%p373) target = $region44
        $region43: #{tpu_custom_call.1} parent=11 // pred_region
          _
        $region44: #{tpu_custom_call.1} parent=11 // pred_fallthru
          _
        // Predicated region
        $region45: #{tpu_custom_call.1} parent=11 // pred_check
          %p376 = pneg %p238
        $region46: #{tpu_custom_call.1} parent=11 // pred_check_branch
          %378 = sbr.rel (%p376) target = $region48
        $region47: #{tpu_custom_call.1} parent=11 // pred_region
          _
        $region48: #{tpu_custom_call.1} parent=11 // pred_fallthru
          _
        // Predicated region
        $region49: #{tpu_custom_call.1} parent=11 // pred_check
          %p379 = pneg %p259
        $region50: #{tpu_custom_call.1} parent=11 // pred_check_branch
          %381 = sbr.rel (%p379) target = $region52
        $region51: #{tpu_custom_call.1} parent=11 // pred_region
          _
        $region52: #{tpu_custom_call.1} parent=11 // pred_fallthru
          _
        // Predicated region
        $region53: #{tpu_custom_call.1} parent=11 // pred_check
          %p382 = pneg %p280
        $region54: #{tpu_custom_call.1} parent=11 // pred_check_branch
          %384 = sbr.rel (%p382) target = $region56
        $region55: #{tpu_custom_call.1} parent=11 // pred_region
          _
        $region56: #{tpu_custom_call.1} parent=11 // pred_fallthru
          _
        // Predicated region
        $region57: #{tpu_custom_call.1} parent=11 // pred_check
          %p385 = pneg %p301
        $region58: #{tpu_custom_call.1} parent=11 // pred_check_branch
          %387 = sbr.rel (%p385) target = $region60
        $region59: #{tpu_custom_call.1} parent=11 // pred_region
          _
        $region60: #{tpu_custom_call.1} parent=11 // pred_fallthru
          _
      $region12: #{tpu_custom_call.1} parent=5 // pred_fallthru
        _
      %p388 = scmp.lt.s32.totalorder %s23, 2
      // Predicated region
      $region61: #{tpu_custom_call.1} parent=5 // pred_check
        %p389 = pneg %p388
      $region62: #{tpu_custom_call.1} parent=5 // pred_check_branch
        %391 = sbr.rel (%p389) target = $region64
      $region63: #{tpu_custom_call.1} parent=5 // pred_region
        // Predicated region
        $region65: #{tpu_custom_call.1} parent=63 // pred_check
          %p392 = pneg %p43
        $region66: #{tpu_custom_call.1} parent=63 // pred_check_branch
          %394 = sbr.rel (%p392) target = $region68
        $region67: #{tpu_custom_call.1} parent=63 // pred_region
          %p395 = scmp.lt.s32.totalorder %s23, 1
          %s396 = scalar_select %p395, %s23, 1
          %s397 = smul.addr %s396, 8
          %s398 = scalar_lea.vmem %s0, %s397
        $region68: #{tpu_custom_call.1} parent=63 // pred_fallthru
          _
      $region64: #{tpu_custom_call.1} parent=5 // pred_fallthru
        _
      %p399 = scmp.le.s32.totalorder 1, %s23
      %p400 = scmp.lt.s32.totalorder %s23, 3
      %p401 = pnand %p399, %p400
      %p402 = pneg %p401
      // Predicated region
      $region69: #{tpu_custom_call.1} parent=5 // pred_check
        _
      $region70: #{tpu_custom_call.1} parent=5 // pred_check_branch
        %404 = sbr.rel (%p401) target = $region72
      $region71: #{tpu_custom_call.1} parent=5 // pred_region
        %s405 = ssub.s32 %s23, 1
        // Predicated region
        $region73: #{tpu_custom_call.1} parent=71 // pred_check
          %p406 = pneg %p196
        $region74: #{tpu_custom_call.1} parent=71 // pred_check_branch
          %408 = sbr.rel (%p406) target = $region76
        $region75: #{tpu_custom_call.1} parent=71 // pred_region
          %409 = dma.done [#allocation3], 256
        $region76: #{tpu_custom_call.1} parent=71 // pred_fallthru
          _
        %p410 = scmp.lt.s32.totalorder %s28, 1
        %s411 = scalar_select %p410, %s28, 1
        %s412 = smul.addr %s411, 8
        %s413 = scalar_lea.vmem %s0, %s412
        %p414 = pneg %p49
        %p415 = pneg %p46
        %p416 = pneg %p70
        %p417 = pneg %p67
        %p418 = pneg %p91
        %p419 = pneg %p88
        %p420 = pneg %p112
        %p421 = pneg %p109
        %p422 = pneg %p133
        %p423 = pneg %p130
        %p424 = pneg %p154
        %p425 = pneg %p151
        %p426 = pneg %p175
        %p427 = pneg %p172
        %p428 = pneg %p196
        %p429 = pneg %p193
        %p430 = pneg %p217
        %p431 = pneg %p214
        %p432 = pneg %p238
        %p433 = pneg %p235
        %p434 = pneg %p259
        %p435 = pneg %p256
        %p436 = pneg %p280
        %p437 = pneg %p277
        %p438 = pneg %p301
        %p439 = pneg %p298
        %p440 = pneg %p327
        %p441 = pneg %p324
        %s442 = sand.u32 %s314, 1
        %s443 = scalar_lea.sflag [#allocation4], %s442
        %s444 = sand.u32 %s314, 1
        %s445 = smul.addr %s444, 8
        %s446 = scalar_lea.vmem [#allocation5], %s445
        %p447 = scmp.lt.s32.totalorder %s28, 1
        %s448 = scalar_select %p447, %s28, 1
        %s449 = smul.addr %s448, 8
        %s450 = scalar_lea.vmem %s0, %s449
        %v452 = vld [vmem:[%s450] sm:$0xff]
        %v453 = vpack.c.bf16 %v452, %v452
        %v454 = vld [vmem:[%s1] sm:$0xf]
        %v455 = vld [vmem:[%s1 + $0x4] sm:$0xf]
        %v456 = vld [vmem:[%s1 + $0x8] sm:$0xf]
        %v457 = vld [vmem:[%s1 + $0xc] sm:$0xf]
        %v458 = vld [vmem:[%s2] sm:$0x1]
        %v460 = vlaneseq
        %v461 = vshrl.u32 %v460, 7
        %v462 = vsub.s32 0, %v461
        %v463 = vrot.slane %v458, %v462
        %v469 = vunpack.c.l.b16 %v454
        %v470 = vunpack.c.l.b16 %v455
        %v471 = vunpack.c.l.b16 %v456
        %v472 = vunpack.c.l.b16 %v457
        %v473 = vpack.c.b16 %v470, %v469
        %v474 = vpack.c.b16 %v472, %v471
        %vm477 = vcmask 261120
        %v479 = vsel %vm477, %v453, 0
        %481 = vmatprep.subr.bf16.mxu0 0
        %482 = vmatpush1.bf16.msra.mxu0 %v473
        %483 = vmatprep.subr.bf16.mxu0 0
        %484 = vmatpush1.bf16.msra.mxu0 %v474
        %485 = vmatprep.subr.bf16.mxu0 0
        %486 = vmatpush1.bf16.msra.mxu0 0
        %487 = vmatprep.subr.bf16.mxu0 0
        %488 = vmatpush1.bf16.msra.mxu0 0
        %489 = vmatprep.subr.bf16.mxu0 0
        %490 = vmatpush1.bf16.msra.mxu0 0
        %491 = vmatprep.subr.bf16.mxu0 0
        %492 = vmatpush1.bf16.msra.mxu0 0
        %493 = vmatprep.subr.bf16.mxu0 0
        %494 = vmatpush1.bf16.msra.mxu0 0
        %495 = vmatprep.subr.bf16.mxu0 0
        %496 = vmatpush1.bf16.msra.mxu0 0
        %497 = vmatprep.subr.bf16.mxu0 0
        %498 = vmatpush1.bf16.msra.mxu0 0
        %499 = vmatprep.subr.bf16.mxu0 0
        %500 = vmatpush1.bf16.msra.mxu0 0
        %501 = vmatprep.subr.bf16.mxu0 0
        %502 = vmatpush1.bf16.msra.mxu0 0
        %503 = vmatprep.subr.bf16.mxu0 0
        %504 = vmatpush1.bf16.msra.mxu0 0
        %505 = vmatprep.subr.bf16.mxu0 0
        %506 = vmatpush1.bf16.msra.mxu0 0
        %507 = vmatprep.subr.bf16.mxu0 0
        %508 = vmatpush1.bf16.msra.mxu0 0
        %509 = vmatprep.subr.bf16.mxu0 0
        %510 = vmatpush1.bf16.msra.mxu0 0
        %511 = vmatprep.subr.bf16.mxu0 0
        %512 = vmatpush1.bf16.msra.mxu0 0
        %513 = vmatprep.mubr.bf16.mxu0 0
        %514 = vmatmul.mubr.bf16.gmra.mrb[0].mxu0 %v479
        %v515 = vpop.f32.mrb[0].mxu0
        %v516 = vadd.f32 %v463, %v515
        %v517 = vpop.f32.mrb[0].mxu0
        %v518 = vpop.f32.mrb[0].mxu0
        %v519 = vpop.f32.mrb[0].mxu0
        %520 = vdwg.mxu0
        %v521 = vlaneseq
        %v522 = vshrl.u32 %v521, 7
        %v523 = vlaneseq
        %v524 = vand.u32 %v523, 127
        %vm525 = vcmp.le.s32.totalorder %v524, %v522
        %v526 = vsel %vm525, 0.0, -1e+09
        %v527 = vmul.f32 %v516, 0.35355338
        %v528 = vpack.c.bf16 %v527, %v527
        %v529 = vpack.c.bf16 %v516, %v516
        %531 = vrot.lane.b32.xlu0 %v529, 96
        %v532 = vpop.permute.xlu0 %531
        %vm533 = vcmask 64512
        %v535 = vsel %vm533, %v528, 0
        %v538 = vsel %vm533, %v532, 0
        %540 = vmatprep.subr.bf16.mxu0 0
        %541 = vmatpush1.bf16.xpose.msra.mxu0 %v538
        %542 = vmatprep.subr.bf16.mxu0 0
        %543 = vmatpush1.bf16.xpose.msra.mxu0 0
        %544 = vmatprep.subr.bf16.mxu0 0
        %545 = vmatpush1.bf16.xpose.msra.mxu0 0
        %546 = vmatprep.subr.bf16.mxu0 0
        %547 = vmatpush1.bf16.xpose.msra.mxu0 0
        %548 = vmatprep.subr.bf16.mxu0 0
        %549 = vmatpush1.bf16.xpose.msra.mxu0 0
        %550 = vmatprep.subr.bf16.mxu0 0
        %551 = vmatpush1.bf16.xpose.msra.mxu0 0
        %552 = vmatprep.subr.bf16.mxu0 0
        %553 = vmatpush1.bf16.xpose.msra.mxu0 0
        %554 = vmatprep.subr.bf16.mxu0 0
        %555 = vmatpush1.bf16.xpose.msra.mxu0 0
        %556 = vmatprep.subr.bf16.mxu0 0
        %557 = vmatpush1.bf16.xpose.msra.mxu0 0
        %558 = vmatprep.subr.bf16.mxu0 0
        %559 = vmatpush1.bf16.xpose.msra.mxu0 0
        %560 = vmatprep.subr.bf16.mxu0 0
        %561 = vmatpush1.bf16.xpose.msra.mxu0 0
        %562 = vmatprep.subr.bf16.mxu0 0
        %563 = vmatpush1.bf16.xpose.msra.mxu0 0
        %564 = vmatprep.subr.bf16.mxu0 0
        %565 = vmatpush1.bf16.xpose.msra.mxu0 0
        %566 = vmatprep.subr.bf16.mxu0 0
        %567 = vmatpush1.bf16.xpose.msra.mxu0 0
        %568 = vmatprep.subr.bf16.mxu0 0
        %569 = vmatpush1.bf16.xpose.msra.mxu0 0
        %570 = vmatprep.subr.bf16.mxu0 0
        %571 = vmatpush1.bf16.xpose.msra.mxu0 0
        %572 = vmatprep.mubr.bf16.mxu0 0
        %573 = vmatmul.mubr.bf16.gmra.mrb[0].mxu0 %v535
        %v574 = vpop.f32.mrb[0].mxu0
        %v575 = vadd.f32 %v526, %v574
        %v576 = vpop.f32.mrb[0].mxu0
        %v577 = vpop.f32.mrb[0].mxu0
        %v578 = vpop.f32.mrb[0].mxu0
        %579 = vdwg.mxu0
        %v580 = vsel %vm533, %v575, -inf
        %581 = vmax.xlane.f32.xlu0 %v580
        %v582 = vpop.xlane.xlu0 %581
        %v583 = vsub.f32 %v575, %v582
        %v584 = vmul.f32 %v583, 1.442695
        %v585 = vpow.pop %v584
        %v586 = vsel %vm533, %v585, 0.0
        %587 = vadd.xlane.f32.xlu0 %v586
        %v588 = vpop.xlane.xlu0 %587
        %v589 = vrcp.pop %v588
        %v590 = vmul.f32 %v585, %v589
        %v591 = vpack.c.bf16 %v590, %v590
        %592 = vrot.lane.b32.xlu0 %v529, 64
        %v593 = vpop.permute.xlu0 %592
        %v595 = vsel %vm533, %v591, 0
        %vm597 = vcmask 1043456
        %v599 = vsel %vm597, %v593, 0
        %601 = vmatprep.subr.bf16.mxu0 0
        %602 = vmatpush1.bf16.msra.mxu0 %v599
        %603 = vmatprep.subr.bf16.mxu0 0
        %604 = vmatpush1.bf16.msra.mxu0 0
        %605 = vmatprep.subr.bf16.mxu0 0
        %606 = vmatpush1.bf16.msra.mxu0 0
        %607 = vmatprep.subr.bf16.mxu0 0
        %608 = vmatpush1.bf16.msra.mxu0 0
        %609 = vmatprep.subr.bf16.mxu0 0
        %610 = vmatpush1.bf16.msra.mxu0 0
        %611 = vmatprep.subr.bf16.mxu0 0
        %612 = vmatpush1.bf16.msra.mxu0 0
        %613 = vmatprep.subr.bf16.mxu0 0
        %614 = vmatpush1.bf16.msra.mxu0 0
        %615 = vmatprep.subr.bf16.mxu0 0
        %616 = vmatpush1.bf16.msra.mxu0 0
        %617 = vmatprep.subr.bf16.mxu0 0
        %618 = vmatpush1.bf16.msra.mxu0 0
        %619 = vmatprep.subr.bf16.mxu0 0
        %620 = vmatpush1.bf16.msra.mxu0 0
        %621 = vmatprep.subr.bf16.mxu0 0
        %622 = vmatpush1.bf16.msra.mxu0 0
        %623 = vmatprep.subr.bf16.mxu0 0
        %624 = vmatpush1.bf16.msra.mxu0 0
        %625 = vmatprep.subr.bf16.mxu0 0
        %626 = vmatpush1.bf16.msra.mxu0 0
        %627 = vmatprep.subr.bf16.mxu0 0
        %628 = vmatpush1.bf16.msra.mxu0 0
        %629 = vmatprep.subr.bf16.mxu0 0
        %630 = vmatpush1.bf16.msra.mxu0 0
        %631 = vmatprep.subr.bf16.mxu0 0
        %632 = vmatpush1.bf16.msra.mxu0 0
        %633 = vmatprep.mubr.bf16.mxu0 0
        %634 = vmatmul.mubr.bf16.gmra.mrb[0].mxu0 %v595
        %v635 = vpop.f32.mrb[0].mxu0
        %v636 = vadd.f32 0.0, %v635
        %v637 = vpop.f32.mrb[0].mxu0
        %v638 = vpop.f32.mrb[0].mxu0
        %v639 = vpop.f32.mrb[0].mxu0
        %640 = vdwg.mxu0
        %642 = vrot.lane.b32.xlu0 %v528, 120
        %v643 = vpop.permute.xlu0 %642
        %644 = vrot.lane.b32.xlu0 %v529, 88
        %v645 = vpop.permute.xlu0 %644
        %v647 = vsel %vm533, %v643, 0
        %v650 = vsel %vm533, %v645, 0
        %652 = vmatprep.subr.bf16.mxu0 0
        %653 = vmatpush1.bf16.xpose.msra.mxu0 %v650
        %654 = vmatprep.subr.bf16.mxu0 0
        %655 = vmatpush1.bf16.xpose.msra.mxu0 0
        %656 = vmatprep.subr.bf16.mxu0 0
        %657 = vmatpush1.bf16.xpose.msra.mxu0 0
        %658 = vmatprep.subr.bf16.mxu0 0
        %659 = vmatpush1.bf16.xpose.msra.mxu0 0
        %660 = vmatprep.subr.bf16.mxu0 0
        %661 = vmatpush1.bf16.xpose.msra.mxu0 0
        %662 = vmatprep.subr.bf16.mxu0 0
        %663 = vmatpush1.bf16.xpose.msra.mxu0 0
        %664 = vmatprep.subr.bf16.mxu0 0
        %665 = vmatpush1.bf16.xpose.msra.mxu0 0
        %666 = vmatprep.subr.bf16.mxu0 0
        %667 = vmatpush1.bf16.xpose.msra.mxu0 0
        %668 = vmatprep.subr.bf16.mxu0 0
        %669 = vmatpush1.bf16.xpose.msra.mxu0 0
        %670 = vmatprep.subr.bf16.mxu0 0
        %671 = vmatpush1.bf16.xpose.msra.mxu0 0
        %672 = vmatprep.subr.bf16.mxu0 0
        %673 = vmatpush1.bf16.xpose.msra.mxu0 0
        %674 = vmatprep.subr.bf16.mxu0 0
        %675 = vmatpush1.bf16.xpose.msra.mxu0 0
        %676 = vmatprep.subr.bf16.mxu0 0
        %677 = vmatpush1.bf16.xpose.msra.mxu0 0
        %678 = vmatprep.subr.bf16.mxu0 0
        %679 = vmatpush1.bf16.xpose.msra.mxu0 0
        %680 = vmatprep.subr.bf16.mxu0 0
        %681 = vmatpush1.bf16.xpose.msra.mxu0 0
        %682 = vmatprep.subr.bf16.mxu0 0
        %683 = vmatpush1.bf16.xpose.msra.mxu0 0
        %684 = vmatprep.mubr.bf16.mxu0 0
        %685 = vmatmul.mubr.bf16.gmra.mrb[0].mxu0 %v647
        %v686 = vpop.f32.mrb[0].mxu0
        %v687 = vadd.f32 %v526, %v686
        %v688 = vpop.f32.mrb[0].mxu0
        %v689 = vpop.f32.mrb[0].mxu0
        %v690 = vpop.f32.mrb[0].mxu0
        %691 = vdwg.mxu0
        %v692 = vsel %vm533, %v687, -inf
        %693 = vmax.xlane.f32.xlu0 %v692
        %v694 = vpop.xlane.xlu0 %693
        %v695 = vsub.f32 %v687, %v694
        %v696 = vmul.f32 %v695, 1.442695
        %v697 = vpow.pop %v696
        %v698 = vsel %vm533, %v697, 0.0
        %699 = vadd.xlane.f32.xlu0 %v698
        %v700 = vpop.xlane.xlu0 %699
        %v701 = vrcp.pop %v700
        %v702 = vmul.f32 %v697, %v701
        %v703 = vpack.c.bf16 %v702, %v702
        %704 = vrot.lane.b32.xlu0 %v529, 56
        %v705 = vpop.permute.xlu0 %704
        %v707 = vsel %vm533, %v703, 0
        %v710 = vsel %vm597, %v705, 0
        %712 = vmatprep.subr.bf16.mxu0 0
        %713 = vmatpush1.bf16.msra.mxu0 %v710
        %714 = vmatprep.subr.bf16.mxu0 0
        %715 = vmatpush1.bf16.msra.mxu0 0
        %716 = vmatprep.subr.bf16.mxu0 0
        %717 = vmatpush1.bf16.msra.mxu0 0
        %718 = vmatprep.subr.bf16.mxu0 0
        %719 = vmatpush1.bf16.msra.mxu0 0
        %720 = vmatprep.subr.bf16.mxu0 0
        %721 = vmatpush1.bf16.msra.mxu0 0
        %722 = vmatprep.subr.bf16.mxu0 0
        %723 = vmatpush1.bf16.msra.mxu0 0
        %724 = vmatprep.subr.bf16.mxu0 0
        %725 = vmatpush1.bf16.msra.mxu0 0
        %726 = vmatprep.subr.bf16.mxu0 0
        %727 = vmatpush1.bf16.msra.mxu0 0
        %728 = vmatprep.subr.bf16.mxu0 0
        %729 = vmatpush1.bf16.msra.mxu0 0
        %730 = vmatprep.subr.bf16.mxu0 0
        %731 = vmatpush1.bf16.msra.mxu0 0
        %732 = vmatprep.subr.bf16.mxu0 0
        %733 = vmatpush1.bf16.msra.mxu0 0
        %734 = vmatprep.subr.bf16.mxu0 0
        %735 = vmatpush1.bf16.msra.mxu0 0
        %736 = vmatprep.subr.bf16.mxu0 0
        %737 = vmatpush1.bf16.msra.mxu0 0
        %738 = vmatprep.subr.bf16.mxu0 0
        %739 = vmatpush1.bf16.msra.mxu0 0
        %740 = vmatprep.subr.bf16.mxu0 0
        %741 = vmatpush1.bf16.msra.mxu0 0
        %742 = vmatprep.subr.bf16.mxu0 0
        %743 = vmatpush1.bf16.msra.mxu0 0
        %744 = vmatprep.mubr.bf16.mxu0 0
        %745 = vmatmul.mubr.bf16.gmra.mrb[0].mxu0 %v707
        %v746 = vpop.f32.mrb[0].mxu0
        %v747 = vadd.f32 0.0, %v746
        %v748 = vpop.f32.mrb[0].mxu0
        %v749 = vpop.f32.mrb[0].mxu0
        %v750 = vpop.f32.mrb[0].mxu0
        %751 = vdwg.mxu0
        %752 = vrot.lane.b32.xlu0 %v528, 112
        %v753 = vpop.permute.xlu0 %752
        %754 = vrot.lane.b32.xlu0 %v529, 80
        %v755 = vpop.permute.xlu0 %754
        %v757 = vsel %vm533, %v753, 0
        %v760 = vsel %vm533, %v755, 0
        %762 = vmatprep.subr.bf16.mxu0 0
        %763 = vmatpush1.bf16.xpose.msra.mxu0 %v760
        %764 = vmatprep.subr.bf16.mxu0 0
        %765 = vmatpush1.bf16.xpose.msra.mxu0 0
        %766 = vmatprep.subr.bf16.mxu0 0
        %767 = vmatpush1.bf16.xpose.msra.mxu0 0
        %768 = vmatprep.subr.bf16.mxu0 0
        %769 = vmatpush1.bf16.xpose.msra.mxu0 0
        %770 = vmatprep.subr.bf16.mxu0 0
        %771 = vmatpush1.bf16.xpose.msra.mxu0 0
        %772 = vmatprep.subr.bf16.mxu0 0
        %773 = vmatpush1.bf16.xpose.msra.mxu0 0
        %774 = vmatprep.subr.bf16.mxu0 0
        %775 = vmatpush1.bf16.xpose.msra.mxu0 0
        %776 = vmatprep.subr.bf16.mxu0 0
        %777 = vmatpush1.bf16.xpose.msra.mxu0 0
        %778 = vmatprep.subr.bf16.mxu0 0
        %779 = vmatpush1.bf16.xpose.msra.mxu0 0
        %780 = vmatprep.subr.bf16.mxu0 0
        %781 = vmatpush1.bf16.xpose.msra.mxu0 0
        %782 = vmatprep.subr.bf16.mxu0 0
        %783 = vmatpush1.bf16.xpose.msra.mxu0 0
        %784 = vmatprep.subr.bf16.mxu0 0
        %785 = vmatpush1.bf16.xpose.msra.mxu0 0
        %786 = vmatprep.subr.bf16.mxu0 0
        %787 = vmatpush1.bf16.xpose.msra.mxu0 0
        %788 = vmatprep.subr.bf16.mxu0 0
        %789 = vmatpush1.bf16.xpose.msra.mxu0 0
        %790 = vmatprep.subr.bf16.mxu0 0
        %791 = vmatpush1.bf16.xpose.msra.mxu0 0
        %792 = vmatprep.subr.bf16.mxu0 0
        %793 = vmatpush1.bf16.xpose.msra.mxu0 0
        %794 = vmatprep.mubr.bf16.mxu0 0
        %795 = vmatmul.mubr.bf16.gmra.mrb[0].mxu0 %v757
        %v796 = vpop.f32.mrb[0].mxu0
        %v797 = vadd.f32 %v526, %v796
        %v798 = vpop.f32.mrb[0].mxu0
        %v799 = vpop.f32.mrb[0].mxu0
        %v800 = vpop.f32.mrb[0].mxu0
        %801 = vdwg.mxu0
        %v802 = vsel %vm533, %v797, -inf
        %803 = vmax.xlane.f32.xlu0 %v802
        %v804 = vpop.xlane.xlu0 %803
        %v805 = vsub.f32 %v797, %v804
        %v806 = vmul.f32 %v805, 1.442695
        %v807 = vpow.pop %v806
        %v808 = vsel %vm533, %v807, 0.0
        %809 = vadd.xlane.f32.xlu0 %v808
        %v810 = vpop.xlane.xlu0 %809
        %v811 = vrcp.pop %v810
        %v812 = vmul.f32 %v807, %v811
        %v813 = vpack.c.bf16 %v812, %v812
        %814 = vrot.lane.b32.xlu0 %v529, 48
        %v815 = vpop.permute.xlu0 %814
        %v817 = vsel %vm533, %v813, 0
        %v820 = vsel %vm597, %v815, 0
        %822 = vmatprep.subr.bf16.mxu0 0
        %823 = vmatpush1.bf16.msra.mxu0 %v820
        %824 = vmatprep.subr.bf16.mxu0 0
        %825 = vmatpush1.bf16.msra.mxu0 0
        %826 = vmatprep.subr.bf16.mxu0 0
        %827 = vmatpush1.bf16.msra.mxu0 0
        %828 = vmatprep.subr.bf16.mxu0 0
        %829 = vmatpush1.bf16.msra.mxu0 0
        %830 = vmatprep.subr.bf16.mxu0 0
        %831 = vmatpush1.bf16.msra.mxu0 0
        %832 = vmatprep.subr.bf16.mxu0 0
        %833 = vmatpush1.bf16.msra.mxu0 0
        %834 = vmatprep.subr.bf16.mxu0 0
        %835 = vmatpush1.bf16.msra.mxu0 0
        %836 = vmatprep.subr.bf16.mxu0 0
        %837 = vmatpush1.bf16.msra.mxu0 0
        %838 = vmatprep.subr.bf16.mxu0 0
        %839 = vmatpush1.bf16.msra.mxu0 0
        %840 = vmatprep.subr.bf16.mxu0 0
        %841 = vmatpush1.bf16.msra.mxu0 0
        %842 = vmatprep.subr.bf16.mxu0 0
        %843 = vmatpush1.bf16.msra.mxu0 0
        %844 = vmatprep.subr.bf16.mxu0 0
        %845 = vmatpush1.bf16.msra.mxu0 0
        %846 = vmatprep.subr.bf16.mxu0 0
        %847 = vmatpush1.bf16.msra.mxu0 0
        %848 = vmatprep.subr.bf16.mxu0 0
        %849 = vmatpush1.bf16.msra.mxu0 0
        %850 = vmatprep.subr.bf16.mxu0 0
        %851 = vmatpush1.bf16.msra.mxu0 0
        %852 = vmatprep.subr.bf16.mxu0 0
        %853 = vmatpush1.bf16.msra.mxu0 0
        %854 = vmatprep.mubr.bf16.mxu0 0
        %855 = vmatmul.mubr.bf16.gmra.mrb[0].mxu0 %v817
        %v856 = vpop.f32.mrb[0].mxu0
        %v857 = vadd.f32 0.0, %v856
        %v858 = vpop.f32.mrb[0].mxu0
        %v859 = vpop.f32.mrb[0].mxu0
        %v860 = vpop.f32.mrb[0].mxu0
        %861 = vdwg.mxu0
        %862 = vrot.lane.b32.xlu0 %v528, 104
        %v863 = vpop.permute.xlu0 %862
        %864 = vrot.lane.b32.xlu0 %v529, 72
        %v865 = vpop.permute.xlu0 %864
        %v867 = vsel %vm533, %v863, 0
        %v870 = vsel %vm533, %v865, 0
        %872 = vmatprep.subr.bf16.mxu0 0
        %873 = vmatpush1.bf16.xpose.msra.mxu0 %v870
        %874 = vmatprep.subr.bf16.mxu0 0
        %875 = vmatpush1.bf16.xpose.msra.mxu0 0
        %876 = vmatprep.subr.bf16.mxu0 0
        %877 = vmatpush1.bf16.xpose.msra.mxu0 0
        %878 = vmatprep.subr.bf16.mxu0 0
        %879 = vmatpush1.bf16.xpose.msra.mxu0 0
        %880 = vmatprep.subr.bf16.mxu0 0
        %881 = vmatpush1.bf16.xpose.msra.mxu0 0
        %882 = vmatprep.subr.bf16.mxu0 0
        %883 = vmatpush1.bf16.xpose.msra.mxu0 0
        %884 = vmatprep.subr.bf16.mxu0 0
        %885 = vmatpush1.bf16.xpose.msra.mxu0 0
        %886 = vmatprep.subr.bf16.mxu0 0
        %887 = vmatpush1.bf16.xpose.msra.mxu0 0
        %888 = vmatprep.subr.bf16.mxu0 0
        %889 = vmatpush1.bf16.xpose.msra.mxu0 0
        %890 = vmatprep.subr.bf16.mxu0 0
        %891 = vmatpush1.bf16.xpose.msra.mxu0 0
        %892 = vmatprep.subr.bf16.mxu0 0
        %893 = vmatpush1.bf16.xpose.msra.mxu0 0
        %894 = vmatprep.subr.bf16.mxu0 0
        %895 = vmatpush1.bf16.xpose.msra.mxu0 0
        %896 = vmatprep.subr.bf16.mxu0 0
        %897 = vmatpush1.bf16.xpose.msra.mxu0 0
        %898 = vmatprep.subr.bf16.mxu0 0
        %899 = vmatpush1.bf16.xpose.msra.mxu0 0
        %900 = vmatprep.subr.bf16.mxu0 0
        %901 = vmatpush1.bf16.xpose.msra.mxu0 0
        %902 = vmatprep.subr.bf16.mxu0 0
        %903 = vmatpush1.bf16.xpose.msra.mxu0 0
        %904 = vmatprep.mubr.bf16.mxu0 0
        %905 = vmatmul.mubr.bf16.gmra.mrb[0].mxu0 %v867
        %v906 = vpop.f32.mrb[0].mxu0
        %v907 = vadd.f32 %v526, %v906
        %v908 = vpop.f32.mrb[0].mxu0
        %v909 = vpop.f32.mrb[0].mxu0
        %v910 = vpop.f32.mrb[0].mxu0
        %911 = vdwg.mxu0
        %v912 = vsel %vm533, %v907, -inf
        %913 = vmax.xlane.f32.xlu0 %v912
        %v914 = vpop.xlane.xlu0 %913
        %v915 = vsub.f32 %v907, %v914
        %v916 = vmul.f32 %v915, 1.442695
        %v917 = vpow.pop %v916
        %v918 = vsel %vm533, %v917, 0.0
        %919 = vadd.xlane.f32.xlu0 %v918
        %v920 = vpop.xlane.xlu0 %919
        %v921 = vrcp.pop %v920
        %v922 = vmul.f32 %v917, %v921
        %v923 = vpack.c.bf16 %v922, %v922
        %924 = vrot.lane.b32.xlu0 %v529, 40
        %v925 = vpop.permute.xlu0 %924
        %v927 = vsel %vm533, %v923, 0
        %v930 = vsel %vm597, %v925, 0
        %932 = vmatprep.subr.bf16.mxu0 0
        %933 = vmatpush1.bf16.msra.mxu0 %v930
        %934 = vmatprep.subr.bf16.mxu0 0
        %935 = vmatpush1.bf16.msra.mxu0 0
        %936 = vmatprep.subr.bf16.mxu0 0
        %937 = vmatpush1.bf16.msra.mxu0 0
        %938 = vmatprep.subr.bf16.mxu0 0
        %939 = vmatpush1.bf16.msra.mxu0 0
        %940 = vmatprep.subr.bf16.mxu0 0
        %941 = vmatpush1.bf16.msra.mxu0 0
        %942 = vmatprep.subr.bf16.mxu0 0
        %943 = vmatpush1.bf16.msra.mxu0 0
        %944 = vmatprep.subr.bf16.mxu0 0
        %945 = vmatpush1.bf16.msra.mxu0 0
        %946 = vmatprep.subr.bf16.mxu0 0
        %947 = vmatpush1.bf16.msra.mxu0 0
        %948 = vmatprep.subr.bf16.mxu0 0
        %949 = vmatpush1.bf16.msra.mxu0 0
        %950 = vmatprep.subr.bf16.mxu0 0
        %951 = vmatpush1.bf16.msra.mxu0 0
        %952 = vmatprep.subr.bf16.mxu0 0
        %953 = vmatpush1.bf16.msra.mxu0 0
        %954 = vmatprep.subr.bf16.mxu0 0
        %955 = vmatpush1.bf16.msra.mxu0 0
        %956 = vmatprep.subr.bf16.mxu0 0
        %957 = vmatpush1.bf16.msra.mxu0 0
        %958 = vmatprep.subr.bf16.mxu0 0
        %959 = vmatpush1.bf16.msra.mxu0 0
        %960 = vmatprep.subr.bf16.mxu0 0
        %961 = vmatpush1.bf16.msra.mxu0 0
        %962 = vmatprep.subr.bf16.mxu0 0
        %963 = vmatpush1.bf16.msra.mxu0 0
        %964 = vmatprep.mubr.bf16.mxu0 0
        %965 = vmatmul.mubr.bf16.gmra.mrb[0].mxu0 %v927
        %v966 = vpop.f32.mrb[0].mxu0
        %v967 = vadd.f32 0.0, %v966
        %v968 = vpop.f32.mrb[0].mxu0
        %v969 = vpop.f32.mrb[0].mxu0
        %v970 = vpop.f32.mrb[0].mxu0
        %971 = vdwg.mxu0
        %973 = vrot.lane.b32.xlu0 %v747, 8
        %v974 = vpop.permute.xlu0 %973
        %977 = vrot.lane.b32.xlu0 %v857, 16
        %v978 = vpop.permute.xlu0 %977
        %981 = vrot.lane.b32.xlu0 %v967, 24
        %v982 = vpop.permute.xlu0 %981
        %v984 = vsel %vm533, %v636, %v974
        %vm985 = vcmask 130048
        %v986 = vsel %vm985, %v984, %v978
        %vm987 = vcmask 195584
        %v988 = vsel %vm987, %v986, %v982
        %v989 = vpack.c.bf16 %v988, %v988
        %v990 = vld [vmem:[%s3] sm:$0xf]
        %v991 = vld [vmem:[%s3 + $0x4] sm:$0xf]
        %v992 = vld [vmem:[%s3 + $0x8] sm:$0xf]
        %v993 = vld [vmem:[%s3 + $0xc] sm:$0xf]
        %v994 = vld [vmem:[%s4] sm:$0x1]
        %v996 = vlaneseq
        %v997 = vshrl.u32 %v996, 7
        %v998 = vsub.s32 0, %v997
        %v999 = vrot.slane %v994, %v998
        %v1005 = vunpack.c.l.b16 %v990
        %v1006 = vunpack.c.l.b16 %v991
        %v1007 = vunpack.c.l.b16 %v992
        %v1008 = vunpack.c.l.b16 %v993
        %v1009 = vpack.c.b16 %v1006, %v1005
        %v1010 = vpack.c.b16 %v1008, %v1007
        %v1014 = vsel %vm477, %v989, 0
        %1016 = vmatprep.subr.bf16.mxu0 0
        %1017 = vmatpush1.bf16.msra.mxu0 %v1009
        %1018 = vmatprep.subr.bf16.mxu0 0
        %1019 = vmatpush1.bf16.msra.mxu0 %v1010
        %1020 = vmatprep.subr.bf16.mxu0 0
        %1021 = vmatpush1.bf16.msra.mxu0 0
        %1022 = vmatprep.subr.bf16.mxu0 0
        %1023 = vmatpush1.bf16.msra.mxu0 0
        %1024 = vmatprep.subr.bf16.mxu0 0
        %1025 = vmatpush1.bf16.msra.mxu0 0
        %1026 = vmatprep.subr.bf16.mxu0 0
        %1027 = vmatpush1.bf16.msra.mxu0 0
        %1028 = vmatprep.subr.bf16.mxu0 0
        %1029 = vmatpush1.bf16.msra.mxu0 0
        %1030 = vmatprep.subr.bf16.mxu0 0
        %1031 = vmatpush1.bf16.msra.mxu0 0
        %1032 = vmatprep.subr.bf16.mxu0 0
        %1033 = vmatpush1.bf16.msra.mxu0 0
        %1034 = vmatprep.subr.bf16.mxu0 0
        %1035 = vmatpush1.bf16.msra.mxu0 0
        %1036 = vmatprep.subr.bf16.mxu0 0
        %1037 = vmatpush1.bf16.msra.mxu0 0
        %1038 = vmatprep.subr.bf16.mxu0 0
        %1039 = vmatpush1.bf16.msra.mxu0 0
        %1040 = vmatprep.subr.bf16.mxu0 0
        %1041 = vmatpush1.bf16.msra.mxu0 0
        %1042 = vmatprep.subr.bf16.mxu0 0
        %1043 = vmatpush1.bf16.msra.mxu0 0
        %1044 = vmatprep.subr.bf16.mxu0 0
        %1045 = vmatpush1.bf16.msra.mxu0 0
        %1046 = vmatprep.subr.bf16.mxu0 0
        %1047 = vmatpush1.bf16.msra.mxu0 0
        %1048 = vmatprep.mubr.bf16.mxu0 0
        %1049 = vmatmul.mubr.bf16.gmra.mrb[0].mxu0 %v1014
        %v1050 = vpop.f32.mrb[0].mxu0
        %v1051 = vadd.f32 %v999, %v1050
        %v1052 = vpop.f32.mrb[0].mxu0
        %v1053 = vpop.f32.mrb[0].mxu0
        %v1054 = vpop.f32.mrb[0].mxu0
        %1055 = vdwg.mxu0
        %v1056 = vadd.f32 %v452, %v1051
        %v1057 = vld [vmem:[%s5] sm:$0x1]
        %v1058 = vld [vmem:[%s6] sm:$0x1]
        %v1059 = vsel %vm477, %v1056, 0.0
        %1060 = vadd.xlane.f32.xlu0 %v1059
        %v1061 = vpop.xlane.xlu0 %1060
        %v1062 = vrcp.pop 32.0
        %v1063 = vmul.f32 %v1061, %v1062
        %v1064 = vsub.f32 %v1056, %v1063
        %v1065 = vmul.f32 %v1064, %v1064
        %v1066 = vsel %vm477, %v1065, 0.0
        %1067 = vadd.xlane.f32.xlu0 %v1066
        %v1068 = vpop.xlane.xlu0 %1067
        %v1069 = vmul.f32 %v1068, %v1062
        %v1070 = vadd.f32 %v1069, 1e-05
        %v1071 = vrsqrt.pop %v1070
        %v1072 = vmul.f32 %v1064, %v1071
        %v1074 = vlaneseq
        %v1075 = vshrl.u32 %v1074, 7
        %v1076 = vsub.s32 0, %v1075
        %v1077 = vrot.slane %v1057, %v1076
        %v1079 = vmul.f32 %v1072, %v1077
        %v1081 = vlaneseq
        %v1082 = vshrl.u32 %v1081, 7
        %v1083 = vsub.s32 0, %v1082
        %v1084 = vrot.slane %v1058, %v1083
        %v1086 = vadd.f32 %v1079, %v1084
        %v1087 = vpack.c.bf16 %v1086, %v1086
        %v1088 = vld [vmem:[#allocation2] sm:$0xf]
        %v1089 = vld [vmem:[#allocation2 + $0x4] sm:$0xf]
        %v1090 = vld [vmem:[#allocation2 + $0x8] sm:$0xf]
        %v1091 = vld [vmem:[#allocation2 + $0xc] sm:$0xf]
        %v1092 = vld [vmem:[%s8] sm:$0x1]
        %v1094 = vlaneseq
        %v1095 = vshrl.u32 %v1094, 7
        %v1096 = vsub.s32 0, %v1095
        %v1097 = vrot.slane %v1092, %v1096
        %v1103 = vunpack.c.l.b16 %v1088
        %v1104 = vunpack.c.l.b16 %v1089
        %v1105 = vunpack.c.l.b16 %v1090
        %v1106 = vunpack.c.l.b16 %v1091
        %v1107 = vpack.c.b16 %v1104, %v1103
        %v1108 = vpack.c.b16 %v1106, %v1105
        %v1112 = vsel %vm477, %v1087, 0
        %1114 = vmatprep.subr.bf16.mxu0 0
        %1115 = vmatpush1.bf16.msra.mxu0 %v1107
        %1116 = vmatprep.subr.bf16.mxu0 0
        %1117 = vmatpush1.bf16.msra.mxu0 %v1108
        %1118 = vmatprep.subr.bf16.mxu0 0
        %1119 = vmatpush1.bf16.msra.mxu0 0
        %1120 = vmatprep.subr.bf16.mxu0 0
        %1121 = vmatpush1.bf16.msra.mxu0 0
        %1122 = vmatprep.subr.bf16.mxu0 0
        %1123 = vmatpush1.bf16.msra.mxu0 0
        %1124 = vmatprep.subr.bf16.mxu0 0
        %1125 = vmatpush1.bf16.msra.mxu0 0
        %1126 = vmatprep.subr.bf16.mxu0 0
        %1127 = vmatpush1.bf16.msra.mxu0 0
        %1128 = vmatprep.subr.bf16.mxu0 0
        %1129 = vmatpush1.bf16.msra.mxu0 0
        %1130 = vmatprep.subr.bf16.mxu0 0
        %1131 = vmatpush1.bf16.msra.mxu0 0
        %1132 = vmatprep.subr.bf16.mxu0 0
        %1133 = vmatpush1.bf16.msra.mxu0 0
        %1134 = vmatprep.subr.bf16.mxu0 0
        %1135 = vmatpush1.bf16.msra.mxu0 0
        %1136 = vmatprep.subr.bf16.mxu0 0
        %1137 = vmatpush1.bf16.msra.mxu0 0
        %1138 = vmatprep.subr.bf16.mxu0 0
        %1139 = vmatpush1.bf16.msra.mxu0 0
        %1140 = vmatprep.subr.bf16.mxu0 0
        %1141 = vmatpush1.bf16.msra.mxu0 0
        %1142 = vmatprep.subr.bf16.mxu0 0
        %1143 = vmatpush1.bf16.msra.mxu0 0
        %1144 = vmatprep.subr.bf16.mxu0 0
        %1145 = vmatpush1.bf16.msra.mxu0 0
        %1146 = vmatprep.mubr.bf16.mxu0 0
        %1147 = vmatmul.mubr.bf16.gmra.mrb[0].mxu0 %v1112
        %v1148 = vpop.f32.mrb[0].mxu0
        %v1149 = vadd.f32 %v1097, %v1148
        %v1150 = vpop.f32.mrb[0].mxu0
        %v1151 = vpop.f32.mrb[0].mxu0
        %v1152 = vpop.f32.mrb[0].mxu0
        %1153 = vdwg.mxu0
        %v1154 = vmax.f32 %v1149, 0.0
        %v1155 = vpack.c.bf16 %v1154, %v1154
        %v1156 = vld [vmem:[%s9] sm:$0xf]
        %v1157 = vld [vmem:[%s9 + $0x4] sm:$0xf]
        %v1158 = vld [vmem:[%s9 + $0x8] sm:$0xf]
        %v1159 = vld [vmem:[%s9 + $0xc] sm:$0xf]
        %v1160 = vld [vmem:[%s9 + $0x10] sm:$0xf]
        %v1161 = vld [vmem:[%s9 + $0x14] sm:$0xf]
        %v1162 = vld [vmem:[%s9 + $0x18] sm:$0xf]
        %v1163 = vld [vmem:[%s9 + $0x1c] sm:$0xf]
        %v1164 = vld [vmem:[%s10] sm:$0x1]
        %v1166 = vlaneseq
        %v1167 = vshrl.u32 %v1166, 7
        %v1168 = vsub.s32 0, %v1167
        %v1169 = vrot.slane %v1164, %v1168
        %v1179 = vunpack.c.l.b16 %v1156
        %v1180 = vunpack.c.l.b16 %v1157
        %v1181 = vunpack.c.l.b16 %v1158
        %v1182 = vunpack.c.l.b16 %v1159
        %v1183 = vunpack.c.l.b16 %v1160
        %v1184 = vunpack.c.l.b16 %v1161
        %v1185 = vunpack.c.l.b16 %v1162
        %v1186 = vunpack.c.l.b16 %v1163
        %v1187 = vpack.c.b16 %v1180, %v1179
        %v1188 = vpack.c.b16 %v1182, %v1181
        %v1189 = vpack.c.b16 %v1184, %v1183
        %v1190 = vpack.c.b16 %v1186, %v1185
        %vm1195 = vcmask 523264
        %v1197 = vsel %vm1195, %v1155, 0
        %1199 = vmatprep.subr.bf16.mxu0 0
        %1200 = vmatpush1.bf16.msra.mxu0 %v1187
        %1201 = vmatprep.subr.bf16.mxu0 0
        %1202 = vmatpush1.bf16.msra.mxu0 %v1188
        %1203 = vmatprep.subr.bf16.mxu0 0
        %1204 = vmatpush1.bf16.msra.mxu0 %v1189
        %1205 = vmatprep.subr.bf16.mxu0 0
        %1206 = vmatpush1.bf16.msra.mxu0 %v1190
        %1207 = vmatprep.subr.bf16.mxu0 0
        %1208 = vmatpush1.bf16.msra.mxu0 0
        %1209 = vmatprep.subr.bf16.mxu0 0
        %1210 = vmatpush1.bf16.msra.mxu0 0
        %1211 = vmatprep.subr.bf16.mxu0 0
        %1212 = vmatpush1.bf16.msra.mxu0 0
        %1213 = vmatprep.subr.bf16.mxu0 0
        %1214 = vmatpush1.bf16.msra.mxu0 0
        %1215 = vmatprep.subr.bf16.mxu0 0
        %1216 = vmatpush1.bf16.msra.mxu0 0
        %1217 = vmatprep.subr.bf16.mxu0 0
        %1218 = vmatpush1.bf16.msra.mxu0 0
        %1219 = vmatprep.subr.bf16.mxu0 0
        %1220 = vmatpush1.bf16.msra.mxu0 0
        %1221 = vmatprep.subr.bf16.mxu0 0
        %1222 = vmatpush1.bf16.msra.mxu0 0
        %1223 = vmatprep.subr.bf16.mxu0 0
        %1224 = vmatpush1.bf16.msra.mxu0 0
        %1225 = vmatprep.subr.bf16.mxu0 0
        %1226 = vmatpush1.bf16.msra.mxu0 0
        %1227 = vmatprep.subr.bf16.mxu0 0
        %1228 = vmatpush1.bf16.msra.mxu0 0
        %1229 = vmatprep.subr.bf16.mxu0 0
        %1230 = vmatpush1.bf16.msra.mxu0 0
        %1231 = vmatprep.mubr.bf16.mxu0 0
        %1232 = vmatmul.mubr.bf16.gmra.mrb[0].mxu0 %v1197
        %v1233 = vpop.f32.mrb[0].mxu0
        %v1234 = vadd.f32 %v1169, %v1233
        %v1235 = vpop.f32.mrb[0].mxu0
        %v1236 = vpop.f32.mrb[0].mxu0
        %v1237 = vpop.f32.mrb[0].mxu0
        %1238 = vdwg.mxu0
        %v1239 = vadd.f32 %v1086, %v1234
        %v1240 = vld [vmem:[%s11] sm:$0x1]
        %v1241 = vld [vmem:[%s12] sm:$0x1]
        %v1242 = vsel %vm477, %v1239, 0.0
        %1243 = vadd.xlane.f32.xlu0 %v1242
        %v1244 = vpop.xlane.xlu0 %1243
        %v1245 = vmul.f32 %v1244, %v1062
        %v1246 = vsub.f32 %v1239, %v1245
        %v1247 = vmul.f32 %v1246, %v1246
        %v1248 = vsel %vm477, %v1247, 0.0
        %1249 = vadd.xlane.f32.xlu0 %v1248
        %v1250 = vpop.xlane.xlu0 %1249
        %v1251 = vmul.f32 %v1250, %v1062
        %v1252 = vadd.f32 %v1251, 1e-05
        %v1253 = vrsqrt.pop %v1252
        %v1254 = vmul.f32 %v1246, %v1253
        %v1256 = vlaneseq
        %v1257 = vshrl.u32 %v1256, 7
        %v1258 = vsub.s32 0, %v1257
        %v1259 = vrot.slane %v1240, %v1258
        %v1261 = vmul.f32 %v1254, %v1259
        %v1263 = vlaneseq
        %v1264 = vshrl.u32 %v1263, 7
        %v1265 = vsub.s32 0, %v1264
        %v1266 = vrot.slane %v1241, %v1265
        %v1268 = vadd.f32 %v1261, %v1266
        %1269 = vst.msk [vmem:[%s446] sm:$0xff] %vm477, %v1268
        %s1270 = sand.u32 %s314, 1
        %s1271 = scalar_lea.sflag [#allocation4], %s1270
        %s1272 = sand.u32 %s314, 1
        %s1273 = smul.addr %s1272, 8
        %s1274 = scalar_lea.vmem [#allocation5], %s1273
        // Predicated region
        $region77: #{tpu_custom_call.1} parent=71 // pred_check
          %p1275 = pneg %p324
        $region78: #{tpu_custom_call.1} parent=71 // pred_check_branch
          %1277 = sbr.rel (%p1275) target = $region80
        $region79: #{tpu_custom_call.1} parent=71 // pred_region
          %s1279 = ssub.s32 128, 128
          %1280 = vsyncadd %s1271, %s1279
          %s1281 = smul.addr %s28, 128
          %s1282 = scalar_lea.hbm %s13, %s1281
          %s1284 = sshll.u32 %s1274, 4
          %s1285 = int_to_ptr.vmem [resolvable:$true] %s1284
          %1287 = dma.vmem_to_hbm [thread:$0]  %s1285, 128, %s1282, %s1271
        $region80: #{tpu_custom_call.1} parent=71 // pred_fallthru
          _
      $region72: #{tpu_custom_call.1} parent=5 // pred_fallthru
        _
      %p1288 = scmp.le.s32.totalorder 2, %s23
      // Predicated region
      $region81: #{tpu_custom_call.1} parent=5 // pred_check
        %p1289 = pneg %p1288
      $region82: #{tpu_custom_call.1} parent=5 // pred_check_branch
        %1291 = sbr.rel (%p1289) target = $region84
      $region83: #{tpu_custom_call.1} parent=5 // pred_region
        %s1292 = ssub.s32 %s23, 2
        // Predicated region
        $region85: #{tpu_custom_call.1} parent=83 // pred_check
          %p1293 = pneg %p330
        $region86: #{tpu_custom_call.1} parent=83 // pred_check_branch
          %1295 = sbr.rel (%p1293) target = $region88
        $region87: #{tpu_custom_call.1} parent=83 // pred_region
          %s1296 = sand.u32 %s315, 1
          %s1297 = scalar_lea.sflag [#allocation4], %s1296
          %s1298 = sand.u32 %s315, 1
          %s1299 = smul.addr %s1298, 8
          %s1300 = scalar_lea.vmem [#allocation5], %s1299
          %1301 = dma.done %s1297, 128
        $region88: #{tpu_custom_call.1} parent=83 // pred_fallthru
          _
      $region84: #{tpu_custom_call.1} parent=5 // pred_fallthru
        _
    $region6: #{tpu_custom_call.1} parent=1 // loop_footer
      %s27 = sadd.s32 1, %s23
    $region7: #{tpu_custom_call.1} parent=1 // loop_footer_branch
      %22 = sbr.rel target = $region3
    $region8: #{tpu_custom_call.1} parent=1 // loop_exit
      _
    %1302 = vsyncpa [#allocation3], 1
    %s1303 = scalar_lea.sflag [#allocation3], 1
    %1304 = vsyncpa %s1303, 1
    %1305 = vsyncpa [#allocation4], 1
    %s1306 = scalar_lea.sflag [#allocation4], 1
    %1307 = vsyncpa %s1306, 1

</llo_original>
